<compile_context>
chip_gen: v5e
topology: v5e:2x2
jax: 0.10.0
libtpu: 0.0.40
codegen_flags: <defaults>
</compile_context>

<pallas_src>
import functools

import jax
import jax.numpy as jnp
from jax.experimental import pallas as pl
from jax.experimental.pallas import tpu as pltpu

EPS = 1e-5
LANE = 128
VMEM_LIMIT = 32 * 1024 * 1024


# --------------------------------------------------------------------------
# Pass 1: conv (fused im2col matmul) per row band + per-band partial stats.
# --------------------------------------------------------------------------
def _conv_stats_kernel(x_ref, w_ref, y_ref, stats_ref, *, kh, kw, band, wo,
                       stride, cin, fused):
    """x_ref:     (1, band_h_in, Wp, Cin)    bf16  padded NHWC row band
       w_ref:     (KH*KW*Cin, Cout_pad)      bf16  im2col-ordered weights
       y_ref:     (band*Wo, Cout_pad)        bf16  conv rows for this band
       stats_ref: (1, 2, Cout_pad)           f32   per-band [sum; sumsq]"""
    x = x_ref[0]                              # (band_h_in, Wp, Cin) bf16
    rows = band * wo
    cout_pad = w_ref.shape[-1]

    def shifted(i, j):                        # (band, Wo, Cin)
        return x[i:i + (band - 1) * stride + 1:stride,
                 j:j + (wo - 1) * stride + 1:stride, :]

    if fused:
        # In-VMEM im2col: single MXU matmul with K = KH*KW*Cin (no HBM im2col,
        # no K=Cin starvation, no kh*kw f32 accumulate passes).
        patches = jnp.concatenate(
            [shifted(i, j) for i in range(kh) for j in range(kw)], axis=-1)
        patches = patches.reshape(rows, kh * kw * cin)
        acc = jnp.dot(patches, w_ref[...], preferred_element_type=jnp.float32)
    else:
        # Large Cin: per-offset matmuls already have K >= 128.
        acc = jnp.zeros((rows, cout_pad), jnp.float32)
        idx = 0
        for i in range(kh):
            for j in range(kw):
                xs = shifted(i, j).reshape(rows, cin)
                acc = acc + jnp.dot(xs, w_ref[pl.ds(idx * cin, cin), :],
                                    preferred_element_type=jnp.float32)
                idx += 1

    # Per-channel partial statistics from the f32 accumulator, then cast y.
    s1 = jnp.sum(acc, axis=0, keepdims=True)            # (1, Cout_pad)
    s2 = jnp.sum(acc * acc, axis=0, keepdims=True)
    stats_ref[0] = jnp.concatenate([s1, s2], axis=0)     # (2, Cout_pad)
    y_ref[...] = acc.astype(y_ref.dtype)


# --------------------------------------------------------------------------
# Pass 2: BatchNorm (batch statistics) + ReLU over M-row tiles.
# --------------------------------------------------------------------------
def _bn_relu_kernel(stats_ref, gamma_ref, beta_ref, y_ref, out_ref, *,
                    m_total):
    inv_m = jnp.float32(1.0 / m_total)                   # trace-time constant
    mean = stats_ref[0:1, :] * inv_m                     # (1, Cout_pad)
    var = jnp.maximum(stats_ref[1:2, :] * inv_m - mean * mean, 0.0)
    inv_std = jax.lax.rsqrt(var + EPS)
    scale = gamma_ref[...] * inv_std
    shift = beta_ref[...] - mean * scale
    y = y_ref[...].astype(jnp.float32)
    out_ref[...] = jnp.maximum(y * scale + shift, 0.0).astype(out_ref.dtype)


# --------------------------------------------------------------------------
# Wrapper
# --------------------------------------------------------------------------
def _pick_band(ho, wo, target_rows=512):
    """Largest divisor band of ho with band*wo <= target and 8 | band*wo."""
    cands = [b for b in range(1, ho + 1)
             if ho % b == 0 and (b * wo) % 8 == 0 and b * wo <= target_rows]
    return max(cands) if cands else ho


def conv_block_forward(x_nchw, conv_weight, bn_gamma, bn_beta,
                       stride=1, padding=1):
    """ConvBlock.forward: relu(bn(conv(x))).  x_nchw: (N, Cin, H, W)."""
    cout, cin, kh, kw = conv_weight.shape
    n, _, h, w = x_nchw.shape
    ho = (h + 2 * padding - kh) // stride + 1
    wo = (w + 2 * padding - kw) // stride + 1
    m = n * ho * wo
    hp, wp = h + 2 * padding, w + 2 * padding

    # Lane-dense Cout; prefer 256-multiples for the 2x256x256 MXU (v6e/v7x).
    lane_mult = 256 if cout > 128 else LANE
    cout_pad = ((cout + lane_mult - 1) // lane_mult) * lane_mult

    # Row-band tiling for pass 1.
    band = _pick_band(ho, wo)
    band_h_in = (band - 1) * stride + kh
    n_bands = ho // band
    rows_per_band = band * wo
    total_bands = n * n_bands

    # Boundary layout glue (NCHW contract of the PyTorch module) + bf16 feed.
    x_nhwc = jnp.transpose(x_nchw, (0, 2, 3, 1)).astype(jnp.bfloat16)
    x_pad = jnp.pad(
        x_nhwc, ((0, 0), (padding, padding), (padding, padding), (0, 0)))
    # Overlapping row bands so the pass-1 BlockSpec stays rectangular.  This
    # duplicates ~band_h_in/band of the (small) input tensor only.
    x_bands = jnp.stack(
        [x_pad[:, r * band * stride: r * band * stride + band_h_in]
         for r in range(n_bands)],
        axis=1).reshape(total_bands, band_h_in, wp, cin)

    # (Cout,Cin,KH,KW) -> (KH*KW*Cin, Cout_pad); column order (i, j, ci)
    # matches the in-kernel im2col concatenation order.
    w2 = jnp.transpose(conv_weight, (2, 3, 1, 0)).reshape(kh * kw * cin, cout)
    w2 = jnp.pad(w2, ((0, 0), (0, cout_pad - cout))).astype(jnp.bfloat16)

    gamma = jnp.pad(bn_gamma.astype(jnp.float32),
                    (0, cout_pad - cout)).reshape(1, cout_pad)
    beta = jnp.pad(bn_beta.astype(jnp.float32),
                   (0, cout_pad - cout)).reshape(1, cout_pad)

    # ---- Pass 1: conv + per-band partial stats.  Fully parallel grid (no
    #      resident accumulator) so v7x can shard bands across its 2 TCs.
    fused = cin < 128
    kernel1 = functools.partial(_conv_stats_kernel, kh=kh, kw=kw, band=band,
                                wo=wo, stride=stride, cin=cin, fused=fused)
    y, partials = pl.pallas_call(
        kernel1,
        out_shape=(jax.ShapeDtypeStruct((m, cout_pad), jnp.bfloat16),
                   jax.ShapeDtypeStruct((total_bands, 2, cout_pad),
                                        jnp.float32)),
        grid_spec=pltpu.PrefetchScalarGridSpec(
            num_scalar_prefetch=0,
            grid=(total_bands,),
            in_specs=[
                pl.BlockSpec((1, band_h_in, wp, cin), lambda g: (g, 0, 0, 0)),
                pl.BlockSpec((kh * kw * cin, cout_pad), lambda g: (0, 0)),
            ],
            out_specs=[
                pl.BlockSpec((rows_per_band, cout_pad), lambda g: (g, 0)),
                pl.BlockSpec((1, 2, cout_pad), lambda g: (g, 0, 0)),
            ]),
        compiler_params=pltpu.CompilerParams(
            dimension_semantics=("parallel",),
            vmem_limit_bytes=VMEM_LIMIT),
    )(x_bands, w2)

    # Tiny XLA reduction of the per-band partials -> (2, Cout_pad).
    stats = jnp.sum(partials, axis=0)

    # ---- Pass 2: BN + ReLU over large M-row tiles (streaming, mem-bound).
    #      tile_m = rows_per_band * k with k | total_bands, targeting <= 1024.
    divs = [d for d in range(1, total_bands + 1)
            if total_bands % d == 0 and rows_per_band * d <= 1024]
    tile_m = rows_per_band * (max(divs) if divs else 1)

    kernel2 = functools.partial(_bn_relu_kernel, m_total=m)
    out_flat = pl.pallas_call(
        kernel2,
        out_shape=jax.ShapeDtypeStruct((m, cout_pad), jnp.float32),
        grid_spec=pltpu.PrefetchScalarGridSpec(
            num_scalar_prefetch=0,
            grid=(m // tile_m,),
            in_specs=[
                pl.BlockSpec((2, cout_pad), lambda i: (0, 0)),
                pl.BlockSpec((1, cout_pad), lambda i: (0, 0)),
                pl.BlockSpec((1, cout_pad), lambda i: (0, 0)),
                pl.BlockSpec((tile_m, cout_pad), lambda i: (i, 0)),
            ],
            out_specs=pl.BlockSpec((tile_m, cout_pad), lambda i: (i, 0))),
        compiler_params=pltpu.CompilerParams(
            dimension_semantics=("parallel",),
            vmem_limit_bytes=VMEM_LIMIT),
    )(stats, gamma, beta, y)

    # NCHW module contract.  If a downstream consumer accepted NHWC / padded
    # channels, this slice + transpose (one extra XLA read+write) could be
    # skipped entirely.
    out_nhwc = out_flat[:, :cout].reshape(n, ho, wo, cout)
    return jnp.transpose(out_nhwc, (0, 3, 1, 2))


# --------------------------------------------------------------------------
# Reference (pure JAX, f32) for correctness checking.
# --------------------------------------------------------------------------
def _reference(x_nchw, conv_weight, bn_gamma, bn_beta, stride=1, padding=1):
    y = jax.lax.conv_general_dilated(
        x_nchw.astype(jnp.float32), conv_weight.astype(jnp.float32),
        window_strides=(stride, stride),
        padding=[(padding, padding), (padding, padding)],
        dimension_numbers=("NCHW", "OIHW", "NCHW"))
    mean = jnp.mean(y, axis=(0, 2, 3), keepdims=True)
    var = jnp.mean((y - mean) ** 2, axis=(0, 2, 3), keepdims=True)
    y_hat = (y - mean) * jax.lax.rsqrt(var + EPS)
    out = y_hat * bn_gamma.reshape(1, -1, 1, 1) + bn_beta.reshape(1, -1, 1, 1)
    return jnp.maximum(out, 0.0)


if __name__ == "__main__":
    key = jax.random.PRNGKey(0)
    keys = jax.random.split(key, 8)

    def check(n, cin, h, w, cout, ks, stride, padding, ks4):
        k_x, k_w, k_g, k_b = ks4
        x = jax.random.normal(k_x, (n, cin, h, w), dtype=jnp.float32)
        conv_w = jax.random.normal(k_w, (cout, cin, ks, ks),
                                   dtype=jnp.float32) * 0.1
        gamma = 1.0 + 0.1 * jax.random.normal(k_g, (cout,), dtype=jnp.float32)
        beta = 0.1 * jax.random.normal(k_b, (cout,), dtype=jnp.float32)

        fwd = jax.jit(functools.partial(conv_block_forward,
                                        stride=stride, padding=padding))
        out = jax.block_until_ready(fwd(x, conv_w, gamma, beta))
        ref = jax.block_until_ready(
            _reference(x, conv_w, gamma, beta, stride, padding))
        assert out.shape == ref.shape, (out.shape, ref.shape)
        # bf16 MXU inputs / bf16 intermediate (f32 accumulation + f32 BN
        # epilogue) -> loosened tolerance vs the f32 reference.
        err = float(jnp.max(jnp.abs(out - ref)))
        assert jnp.allclose(out, ref, atol=3e-2, rtol=3e-2), err

    # Primary shape from the module spec (batch=2, channels=4, spatial=16).
    check(2, 4, 16, 16, 8, 3, 1, 1, keys[:4])
    # Second shape exercises multi-band pass-1 tiling + partial-stats reduce.
    check(2, 3, 32, 32, 16, 3, 1, 1, keys[4:])

    print("KERNEL_OK")
</pallas_src>

<mosaic_0001>
module attributes {stable_mosaic.version = 11 : i64} {
  func.func @_conv_stats_kernel(%arg0: i32, %arg1: memref<1x18x18x4xbf16, #tpu.memory_space<vmem>>, %arg2: memref<36x128xbf16, #tpu.memory_space<vmem>>, %arg3: memref<256x128xbf16, #tpu.memory_space<vmem>>, %arg4: memref<1x2x128xf32, #tpu.memory_space<vmem>>) attributes {dimension_semantics = [#tpu.dimension_semantics<parallel>], iteration_bounds = array<i64: 2>, scalar_prefetch = 0 : i64, scratch_operands = 0 : i64, tpu.core_type = #tpu.core_type<tc>, window_params = [{transform_indices = @transform_0, window_bounds = array<i64: 1, 18, 18, 4>}, {pipeline_mode = #tpu.pipeline_mode<synchronous>, transform_indices = @transform_1, window_bounds = array<i64: 36, 128>}, {transform_indices = @transform_2, window_bounds = array<i64: 256, 128>}, {transform_indices = @transform_3, window_bounds = array<i64: 1, 2, 128>}]} {
    %c0 = arith.constant 0 : index
    %c0_0 = arith.constant 0 : index
    %c0_1 = arith.constant 0 : index
    %c0_2 = arith.constant 0 : index
    %0 = vector.load %arg1[%c0, %c0_0, %c0_1, %c0_2] : memref<1x18x18x4xbf16, #tpu.memory_space<vmem>>, vector<1x18x18x4xbf16>
    %1 = vector.shape_cast %0 : vector<1x18x18x4xbf16> to vector<18x18x4xbf16>
    %2 = vector.extract_strided_slice %1 {offsets = [0, 0, 0], sizes = [16, 16, 4], strides = [1, 1, 1]} : vector<18x18x4xbf16> to vector<16x16x4xbf16>
    %3 = vector.extract_strided_slice %1 {offsets = [0, 1, 0], sizes = [16, 16, 4], strides = [1, 1, 1]} : vector<18x18x4xbf16> to vector<16x16x4xbf16>
    %4 = vector.extract_strided_slice %1 {offsets = [0, 2, 0], sizes = [16, 16, 4], strides = [1, 1, 1]} : vector<18x18x4xbf16> to vector<16x16x4xbf16>
    %5 = vector.extract_strided_slice %1 {offsets = [1, 0, 0], sizes = [16, 16, 4], strides = [1, 1, 1]} : vector<18x18x4xbf16> to vector<16x16x4xbf16>
    %6 = vector.extract_strided_slice %1 {offsets = [1, 1, 0], sizes = [16, 16, 4], strides = [1, 1, 1]} : vector<18x18x4xbf16> to vector<16x16x4xbf16>
    %7 = vector.extract_strided_slice %1 {offsets = [1, 2, 0], sizes = [16, 16, 4], strides = [1, 1, 1]} : vector<18x18x4xbf16> to vector<16x16x4xbf16>
    %8 = vector.extract_strided_slice %1 {offsets = [2, 0, 0], sizes = [16, 16, 4], strides = [1, 1, 1]} : vector<18x18x4xbf16> to vector<16x16x4xbf16>
    %9 = vector.extract_strided_slice %1 {offsets = [2, 1, 0], sizes = [16, 16, 4], strides = [1, 1, 1]} : vector<18x18x4xbf16> to vector<16x16x4xbf16>
    %10 = vector.extract_strided_slice %1 {offsets = [2, 2, 0], sizes = [16, 16, 4], strides = [1, 1, 1]} : vector<18x18x4xbf16> to vector<16x16x4xbf16>
    %11 = tpu.concatenate %2, %3, %4, %5, %6, %7, %8, %9, %10 in 2 : vector<16x16x4xbf16>, vector<16x16x4xbf16>, vector<16x16x4xbf16>, vector<16x16x4xbf16>, vector<16x16x4xbf16>, vector<16x16x4xbf16>, vector<16x16x4xbf16>, vector<16x16x4xbf16>, vector<16x16x4xbf16> -> vector<16x16x36xbf16>
    %12 = vector.shape_cast %11 : vector<16x16x36xbf16> to vector<256x36xbf16>
    %c0_3 = arith.constant 0 : index
    %c0_4 = arith.constant 0 : index
    %13 = vector.load %arg2[%c0_3, %c0_4] : memref<36x128xbf16, #tpu.memory_space<vmem>>, vector<36x128xbf16>
    %cst = arith.constant dense<0.000000e+00> : vector<256x128xf32>
    %14 = tpu.matmul %12, %13, %cst {dimension_numbers = #tpu.dot_dimension_numbers<[1], [0], [0], [1], [0, 0, 1, 1], [], []>} : vector<256x36xbf16>, vector<36x128xbf16>, vector<256x128xf32> -> vector<256x128xf32>
    %cst_5 = arith.constant dense<0.000000e+00> : vector<128xf32>
    %15 = vector.multi_reduction <add>, %14, %cst_5 [0] : vector<256x128xf32> to vector<128xf32>
    %16 = vector.shape_cast %15 : vector<128xf32> to vector<1x128xf32>
    %17 = arith.mulf %14, %14 : vector<256x128xf32>
    %cst_6 = arith.constant dense<0.000000e+00> : vector<128xf32>
    %18 = vector.multi_reduction <add>, %17, %cst_6 [0] : vector<256x128xf32> to vector<128xf32>
    %19 = vector.shape_cast %18 : vector<128xf32> to vector<1x128xf32>
    %20 = tpu.concatenate %16, %19 in 0 : vector<1x128xf32>, vector<1x128xf32> -> vector<2x128xf32>
    %c0_7 = arith.constant 0 : index
    %c0_8 = arith.constant 0 : index
    %c0_9 = arith.constant 0 : index
    %21 = vector.load %arg4[%c0_7, %c0_8, %c0_9] : memref<1x2x128xf32, #tpu.memory_space<vmem>>, vector<1x2x128xf32>
    %22 = vector.shape_cast %21 : vector<1x2x128xf32> to vector<2x128xf32>
    %23 = vector.shape_cast %20 : vector<2x128xf32> to vector<1x2x128xf32>
    tpu.vector_store %arg4[%c0_7, %c0_8, %c0_9], %23 {strides = array<i32>} : memref<1x2x128xf32, #tpu.memory_space<vmem>>, vector<1x2x128xf32>,
    %24 = arith.truncf %14 : vector<256x128xf32> to vector<256x128xbf16>
    %c0_10 = arith.constant 0 : index
    %c0_11 = arith.constant 0 : index
    %25 = vector.load %arg3[%c0_10, %c0_11] : memref<256x128xbf16, #tpu.memory_space<vmem>>, vector<256x128xbf16>
    tpu.vector_store %arg3[%c0_10, %c0_11], %24 {strides = array<i32>} : memref<256x128xbf16, #tpu.memory_space<vmem>>, vector<256x128xbf16>,
    return
  }
  func.func @transform_0(%arg0: i32) -> (i32, i32, i32, i32) {
    %c0_i32 = arith.constant 0 : i32
    %c0_i32_0 = arith.constant 0 : i32
    %c0_i32_1 = arith.constant 0 : i32
    %c0_i32_2 = arith.constant 0 : i32
    return %arg0, %c0_i32, %c0_i32_0, %c0_i32_1 : i32, i32, i32, i32
  }
  func.func @transform_1(%arg0: i32) -> (i32, i32) {
    %c0_i32 = arith.constant 0 : i32
    %c0_i32_0 = arith.constant 0 : i32
    %c0_i32_1 = arith.constant 0 : i32
    return %c0_i32, %c0_i32_0 : i32, i32
  }
  func.func @transform_2(%arg0: i32) -> (i32, i32) {
    %c0_i32 = arith.constant 0 : i32
    %c0_i32_0 = arith.constant 0 : i32
    return %arg0, %c0_i32 : i32, i32
  }
  func.func @transform_3(%arg0: i32) -> (i32, i32, i32) {
    %c0_i32 = arith.constant 0 : i32
    %c0_i32_0 = arith.constant 0 : i32
    %c0_i32_1 = arith.constant 0 : i32
    return %arg0, %c0_i32, %c0_i32_0 : i32, i32, i32
  }
}

module attributes {stable_mosaic.version = 11 : i64} {
  func.func @_bn_relu_kernel(%arg0: i32, %arg1: memref<2x128xf32, #tpu.memory_space<vmem>>, %arg2: memref<1x128xf32, #tpu.memory_space<vmem>>, %arg3: memref<1x128xf32, #tpu.memory_space<vmem>>, %arg4: memref<512x128xbf16, #tpu.memory_space<vmem>>, %arg5: memref<512x128xf32, #tpu.memory_space<vmem>>) attributes {dimension_semantics = [#tpu.dimension_semantics<parallel>], iteration_bounds = array<i64: 1>, scalar_prefetch = 0 : i64, scratch_operands = 0 : i64, tpu.core_type = #tpu.core_type<tc>, window_params = [{pipeline_mode = #tpu.pipeline_mode<synchronous>, transform_indices = @transform_0, window_bounds = array<i64: 2, 128>}, {pipeline_mode = #tpu.pipeline_mode<synchronous>, transform_indices = @transform_1, window_bounds = array<i64: 1, 128>}, {pipeline_mode = #tpu.pipeline_mode<synchronous>, transform_indices = @transform_2, window_bounds = array<i64: 1, 128>}, {transform_indices = @transform_3, window_bounds = array<i64: 512, 128>}, {transform_indices = @transform_4, window_bounds = array<i64: 512, 128>}]} {
    %c0 = arith.constant 0 : index
    %c0_0 = arith.constant 0 : index
    %0 = vector.load %arg1[%c0, %c0_0] : memref<2x128xf32, #tpu.memory_space<vmem>>, vector<1x128xf32>
    %cst = arith.constant 0.001953125 : f32
    %1 = vector.broadcast %cst : f32 to vector<1x128xf32>
    %2 = arith.mulf %0, %1 : vector<1x128xf32>
    %c1 = arith.constant 1 : index
    %c0_1 = arith.constant 0 : index
    %3 = vector.load %arg1[%c1, %c0_1] : memref<2x128xf32, #tpu.memory_space<vmem>>, vector<1x128xf32>
    %cst_2 = arith.constant 0.001953125 : f32
    %4 = vector.broadcast %cst_2 : f32 to vector<1x128xf32>
    %5 = arith.mulf %3, %4 : vector<1x128xf32>
    %6 = arith.mulf %2, %2 : vector<1x128xf32>
    %7 = arith.subf %5, %6 : vector<1x128xf32>
    %cst_3 = arith.constant 0.000000e+00 : f32
    %8 = vector.broadcast %cst_3 : f32 to vector<1x128xf32>
    %9 = arith.maximumf %7, %8 : vector<1x128xf32>
    %cst_4 = arith.constant 9.99999974E-6 : f32
    %10 = vector.broadcast %cst_4 : f32 to vector<1x128xf32>
    %11 = arith.addf %9, %10 : vector<1x128xf32>
    %12 = math.rsqrt %11 : vector<1x128xf32>
    %c0_5 = arith.constant 0 : index
    %c0_6 = arith.constant 0 : index
    %13 = vector.load %arg2[%c0_5, %c0_6] : memref<1x128xf32, #tpu.memory_space<vmem>>, vector<1x128xf32>
    %14 = arith.mulf %13, %12 : vector<1x128xf32>
    %c0_7 = arith.constant 0 : index
    %c0_8 = arith.constant 0 : index
    %15 = vector.load %arg3[%c0_7, %c0_8] : memref<1x128xf32, #tpu.memory_space<vmem>>, vector<1x128xf32>
    %16 = arith.mulf %2, %14 : vector<1x128xf32>
    %17 = arith.subf %15, %16 : vector<1x128xf32>
    %c0_9 = arith.constant 0 : index
    %c0_10 = arith.constant 0 : index
    %18 = vector.load %arg4[%c0_9, %c0_10] : memref<512x128xbf16, #tpu.memory_space<vmem>>, vector<512x128xbf16>
    %19 = arith.extf %18 : vector<512x128xbf16> to vector<512x128xf32>
    %20 = vector.broadcast %14 : vector<1x128xf32> to vector<512x128xf32>
    %21 = arith.mulf %19, %20 : vector<512x128xf32>
    %22 = vector.broadcast %17 : vector<1x128xf32> to vector<512x128xf32>
    %23 = arith.addf %21, %22 : vector<512x128xf32>
    %cst_11 = arith.constant 0.000000e+00 : f32
    %24 = vector.broadcast %cst_11 : f32 to vector<512x128xf32>
    %25 = arith.maximumf %23, %24 : vector<512x128xf32>
    %c0_12 = arith.constant 0 : index
    %c0_13 = arith.constant 0 : index
    %26 = vector.load %arg5[%c0_12, %c0_13] : memref<512x128xf32, #tpu.memory_space<vmem>>, vector<512x128xf32>
    tpu.vector_store %arg5[%c0_12, %c0_13], %25 {strides = array<i32>} : memref<512x128xf32, #tpu.memory_space<vmem>>, vector<512x128xf32>,
    return
  }
  func.func @transform_0(%arg0: i32) -> (i32, i32) {
    %c0_i32 = arith.constant 0 : i32
    %c0_i32_0 = arith.constant 0 : i32
    %c0_i32_1 = arith.constant 0 : i32
    return %c0_i32, %c0_i32_0 : i32, i32
  }
  func.func @transform_1(%arg0: i32) -> (i32, i32) {
    %c0_i32 = arith.constant 0 : i32
    %c0_i32_0 = arith.constant 0 : i32
    %c0_i32_1 = arith.constant 0 : i32
    return %c0_i32, %c0_i32_0 : i32, i32
  }
  func.func @transform_2(%arg0: i32) -> (i32, i32) {
    %c0_i32 = arith.constant 0 : i32
    %c0_i32_0 = arith.constant 0 : i32
    %c0_i32_1 = arith.constant 0 : i32
    return %c0_i32, %c0_i32_0 : i32, i32
  }
  func.func @transform_3(%arg0: i32) -> (i32, i32) {
    %c0_i32 = arith.constant 0 : i32
    %c0_i32_0 = arith.constant 0 : i32
    return %arg0, %c0_i32 : i32, i32
  }
  func.func @transform_4(%arg0: i32) -> (i32, i32) {
    %c0_i32 = arith.constant 0 : i32
    %c0_i32_0 = arith.constant 0 : i32
    return %arg0, %c0_i32 : i32, i32
  }
}

</mosaic_0001>

<llo_original>
// kernel: conv_block_forward.3
$region0: #{conv_block_forward.3}
  #allocation0 [shape = 'u32[]', space=smem, size = 0x4, offset = 0x4, fixed_abs, tag = 'smem constant byte address 0x4 - core index']
  #allocation1 [shape = 'u32[72,128]{1,0:T(1,128)}', space=vmem, size = 0x9000, scoped, tag = 'internal scratch']
  %s0 = inlined_call_operand.vmem [shape: f32[2,128], index: 0, kind: input, shape index: {}]
  %s1 = inlined_call_operand.vmem [shape: f32[1,128], index: 1, kind: input, shape index: {}]
  %s2 = inlined_call_operand.vmem [shape: f32[1,128], index: 2, kind: input, shape index: {}]
  %s3 = inlined_call_operand.vmem [shape: bf16[512,128], index: 3, kind: input, shape index: {}]
  %s4 = inlined_call_operand.vmem [shape: f32[512,128], index: 4, kind: output, shape index: {}]
  %s5 = sld [smem:[#allocation0]]
  $region26: #{conv_block_forward.3} parent=0
    _
  %s7 = ssub.s32 1, %s5
  %s8 = scalar_select 0, %s7, %s5
  // Predicated region
  $region2: #{conv_block_forward.3} parent=0 // pred_check
    _
  $region3: #{conv_block_forward.3} parent=0 // pred_check_branch
    %10 = sbr.rel (0) target = $region5
  $region4: #{conv_block_forward.3} parent=0 // pred_region
    _
  $region5: #{conv_block_forward.3} parent=0 // pred_fallthru
    _
  // Predicated region
  $region6: #{conv_block_forward.3} parent=0 // pred_check
    _
  $region7: #{conv_block_forward.3} parent=0 // pred_check_branch
    %12 = sbr.rel (0) target = $region9
  $region8: #{conv_block_forward.3} parent=0 // pred_region
    _
  $region9: #{conv_block_forward.3} parent=0 // pred_fallthru
    _
  // Predicated region
  $region10: #{conv_block_forward.3} parent=0 // pred_check
    _
  $region11: #{conv_block_forward.3} parent=0 // pred_check_branch
    %14 = sbr.rel (0) target = $region13
  $region12: #{conv_block_forward.3} parent=0 // pred_region
    _
  $region13: #{conv_block_forward.3} parent=0 // pred_fallthru
    _
  // Predicated region
  $region14: #{conv_block_forward.3} parent=0 // pred_check
    _
  $region15: #{conv_block_forward.3} parent=0 // pred_check_branch
    %16 = sbr.rel (0) target = $region17
  $region16: #{conv_block_forward.3} parent=0 // pred_region
    _
  $region17: #{conv_block_forward.3} parent=0 // pred_fallthru
    _
  %v17 = vld [vmem:[%s0] sm:$0x1]
  %v18 = vmul.f32 %v17, 0.001953125
  %v19 = vld [vmem:[%s0 + $0x1] sm:$0x1]
  %v20 = vmul.f32 %v19, 0.001953125
  %v21 = vmul.f32 %v18, %v18
  %v22 = vsub.f32 %v20, %v21
  %v23 = vmax.f32 %v22, 0.0
  %v24 = vadd.f32 %v23, 1e-05
  %v25 = vrsqrt.pop %v24
  %v26 = vmul.f32 %v25, %v24
  %v27 = vmul.f32 %v26, %v25
  %v28 = vmul.f32 0.5, %v27
  %v29 = vsub.f32 1.5, %v28
  %v30 = vmul.f32 %v25, %v29
  %vm31 = vweird.f32 %v24
  %vm32 = vweird.f32 %v25
  %vm33 = vmor %vm31, %vm32
  %v34 = vsel %vm33, %v25, %v30
  %v35 = vld [vmem:[%s1] sm:$0x1]
  %v36 = vmul.f32 %v35, %v34
  %v37 = vld [vmem:[%s2] sm:$0x1]
  %v38 = vmul.f32 %v18, %v36
  %v39 = vsub.f32 %v37, %v38
  %v40 = vld [vmem:[%s3] sm:$0xf]
  %v41 = vld [vmem:[%s3 + $0x4] sm:$0xf]
  %v42 = vld [vmem:[%s3 + $0x8] sm:$0xf]
  %v43 = vld [vmem:[%s3 + $0xc] sm:$0xf]
  %v44 = vld [vmem:[%s3 + $0x10] sm:$0xf]
  %v45 = vld [vmem:[%s3 + $0x14] sm:$0xf]
  %v46 = vld [vmem:[%s3 + $0x18] sm:$0xf]
  %v47 = vld [vmem:[%s3 + $0x1c] sm:$0xf]
  %v48 = vld [vmem:[%s3 + $0x20] sm:$0xf]
  %v49 = vld [vmem:[%s3 + $0x24] sm:$0xf]
  %v50 = vld [vmem:[%s3 + $0x28] sm:$0xf]
  %v51 = vld [vmem:[%s3 + $0x2c] sm:$0xf]
  %v52 = vld [vmem:[%s3 + $0x30] sm:$0xf]
  %v53 = vld [vmem:[%s3 + $0x34] sm:$0xf]
  %v54 = vld [vmem:[%s3 + $0x38] sm:$0xf]
  %v55 = vld [vmem:[%s3 + $0x3c] sm:$0xf]
  %v56 = vld [vmem:[%s3 + $0x40] sm:$0xf]
  %v57 = vld [vmem:[%s3 + $0x44] sm:$0xf]
  %v58 = vld [vmem:[%s3 + $0x48] sm:$0xf]
  %v59 = vld [vmem:[%s3 + $0x4c] sm:$0xf]
  %v60 = vld [vmem:[%s3 + $0x50] sm:$0xf]
  %v61 = vld [vmem:[%s3 + $0x54] sm:$0xf]
  %v62 = vld [vmem:[%s3 + $0x58] sm:$0xf]
  %v63 = vld [vmem:[%s3 + $0x5c] sm:$0xf]
  %v64 = vld [vmem:[%s3 + $0x60] sm:$0xf]
  %v65 = vld [vmem:[%s3 + $0x64] sm:$0xf]
  %v66 = vld [vmem:[%s3 + $0x68] sm:$0xf]
  %v67 = vld [vmem:[%s3 + $0x6c] sm:$0xf]
  %v68 = vld [vmem:[%s3 + $0x70] sm:$0xf]
  %v69 = vld [vmem:[%s3 + $0x74] sm:$0xf]
  %v70 = vld [vmem:[%s3 + $0x78] sm:$0xf]
  %v71 = vld [vmem:[%s3 + $0x7c] sm:$0xf]
  %v72 = vld [vmem:[%s3 + $0x80] sm:$0xf]
  %v73 = vld [vmem:[%s3 + $0x84] sm:$0xf]
  %v74 = vld [vmem:[%s3 + $0x88] sm:$0xf]
  %v75 = vld [vmem:[%s3 + $0x8c] sm:$0xf]
  %v76 = vld [vmem:[%s3 + $0x90] sm:$0xf]
  %v77 = vld [vmem:[%s3 + $0x94] sm:$0xf]
  %v78 = vld [vmem:[%s3 + $0x98] sm:$0xf]
  %v79 = vld [vmem:[%s3 + $0x9c] sm:$0xf]
  %v80 = vld [vmem:[%s3 + $0xa0] sm:$0xf]
  %v81 = vld [vmem:[%s3 + $0xa4] sm:$0xf]
  %v82 = vld [vmem:[%s3 + $0xa8] sm:$0xf]
  %v83 = vld [vmem:[%s3 + $0xac] sm:$0xf]
  %v84 = vld [vmem:[%s3 + $0xb0] sm:$0xf]
  %v85 = vld [vmem:[%s3 + $0xb4] sm:$0xf]
  %v86 = vld [vmem:[%s3 + $0xb8] sm:$0xf]
  %v87 = vld [vmem:[%s3 + $0xbc] sm:$0xf]
  %v88 = vld [vmem:[%s3 + $0xc0] sm:$0xf]
  %v89 = vld [vmem:[%s3 + $0xc4] sm:$0xf]
  %v90 = vld [vmem:[%s3 + $0xc8] sm:$0xf]
  %v91 = vld [vmem:[%s3 + $0xcc] sm:$0xf]
  %v92 = vld [vmem:[%s3 + $0xd0] sm:$0xf]
  %v93 = vld [vmem:[%s3 + $0xd4] sm:$0xf]
  %v94 = vld [vmem:[%s3 + $0xd8] sm:$0xf]
  %v95 = vld [vmem:[%s3 + $0xdc] sm:$0xf]
  %v96 = vld [vmem:[%s3 + $0xe0] sm:$0xf]
  %v97 = vld [vmem:[%s3 + $0xe4] sm:$0xf]
  %v98 = vld [vmem:[%s3 + $0xe8] sm:$0xf]
  %v99 = vld [vmem:[%s3 + $0xec] sm:$0xf]
  %v100 = vld [vmem:[%s3 + $0xf0] sm:$0xf]
  %v101 = vld [vmem:[%s3 + $0xf4] sm:$0xf]
  %v102 = vld [vmem:[%s3 + $0xf8] sm:$0xf]
  %v103 = vld [vmem:[%s3 + $0xfc] sm:$0xf]
  %v104 = vunpack.c.l.bf16 %v40
  %v105 = vunpack.c.l.bf16 %v41
  %v106 = vunpack.c.l.bf16 %v42
  %v107 = vunpack.c.l.bf16 %v43
  %v108 = vunpack.c.l.bf16 %v44
  %v109 = vunpack.c.l.bf16 %v45
  %v110 = vunpack.c.l.bf16 %v46
  %v111 = vunpack.c.l.bf16 %v47
  %v112 = vunpack.c.l.bf16 %v48
  %v113 = vunpack.c.l.bf16 %v49
  %v114 = vunpack.c.l.bf16 %v50
  %v115 = vunpack.c.l.bf16 %v51
  %v116 = vunpack.c.l.bf16 %v52
  %v117 = vunpack.c.l.bf16 %v53
  %v118 = vunpack.c.l.bf16 %v54
  %v119 = vunpack.c.l.bf16 %v55
  %v120 = vunpack.c.l.bf16 %v56
  %v121 = vunpack.c.l.bf16 %v57
  %v122 = vunpack.c.l.bf16 %v58
  %v123 = vunpack.c.l.bf16 %v59
  %v124 = vunpack.c.l.bf16 %v60
  %v125 = vunpack.c.l.bf16 %v61
  %v126 = vunpack.c.l.bf16 %v62
  %v127 = vunpack.c.l.bf16 %v63
  %v128 = vunpack.c.l.bf16 %v64
  %v129 = vunpack.c.l.bf16 %v65
  %v130 = vunpack.c.l.bf16 %v66
  %v131 = vunpack.c.l.bf16 %v67
  %v132 = vunpack.c.l.bf16 %v68
  %v133 = vunpack.c.l.bf16 %v69
  %v134 = vunpack.c.l.bf16 %v70
  %v135 = vunpack.c.l.bf16 %v71
  %v136 = vunpack.c.l.bf16 %v72
  %v137 = vunpack.c.l.bf16 %v73
  %v138 = vunpack.c.l.bf16 %v74
  %v139 = vunpack.c.l.bf16 %v75
  %v140 = vunpack.c.l.bf16 %v76
  %v141 = vunpack.c.l.bf16 %v77
  %v142 = vunpack.c.l.bf16 %v78
  %v143 = vunpack.c.l.bf16 %v79
  %v144 = vunpack.c.l.bf16 %v80
  %v145 = vunpack.c.l.bf16 %v81
  %v146 = vunpack.c.l.bf16 %v82
  %v147 = vunpack.c.l.bf16 %v83
  %v148 = vunpack.c.l.bf16 %v84
  %v149 = vunpack.c.l.bf16 %v85
  %v150 = vunpack.c.l.bf16 %v86
  %v151 = vunpack.c.l.bf16 %v87
  %v152 = vunpack.c.l.bf16 %v88
  %v153 = vunpack.c.l.bf16 %v89
  %v154 = vunpack.c.l.bf16 %v90
  %v155 = vunpack.c.l.bf16 %v91
  %v156 = vunpack.c.l.bf16 %v92
  %v157 = vunpack.c.l.bf16 %v93
  %v158 = vunpack.c.l.bf16 %v94
  %v159 = vunpack.c.l.bf16 %v95
  %v160 = vunpack.c.l.bf16 %v96
  %v161 = vunpack.c.l.bf16 %v97
  %v162 = vunpack.c.l.bf16 %v98
  %v163 = vunpack.c.l.bf16 %v99
  %v164 = vunpack.c.l.bf16 %v100
  %v165 = vunpack.c.l.bf16 %v101
  %v166 = vunpack.c.l.bf16 %v102
  %v167 = vunpack.c.l.bf16 %v103
  %v169 = vperm.slane %v36, 0
  %v171 = vmul.f32 %v104, %v169
  %v172 = vmul.f32 %v105, %v169
  %v173 = vmul.f32 %v106, %v169
  %v174 = vmul.f32 %v107, %v169
  %v175 = vmul.f32 %v108, %v169
  %v176 = vmul.f32 %v109, %v169
  %v177 = vmul.f32 %v110, %v169
  %v178 = vmul.f32 %v111, %v169
  %v179 = vmul.f32 %v112, %v169
  %v180 = vmul.f32 %v113, %v169
  %v181 = vmul.f32 %v114, %v169
  %v182 = vmul.f32 %v115, %v169
  %v183 = vmul.f32 %v116, %v169
  %v184 = vmul.f32 %v117, %v169
  %v185 = vmul.f32 %v118, %v169
  %v186 = vmul.f32 %v119, %v169
  %v187 = vmul.f32 %v120, %v169
  %v188 = vmul.f32 %v121, %v169
  %v189 = vmul.f32 %v122, %v169
  %v190 = vmul.f32 %v123, %v169
  %v191 = vmul.f32 %v124, %v169
  %v192 = vmul.f32 %v125, %v169
  %v193 = vmul.f32 %v126, %v169
  %v194 = vmul.f32 %v127, %v169
  %v195 = vmul.f32 %v128, %v169
  %v196 = vmul.f32 %v129, %v169
  %v197 = vmul.f32 %v130, %v169
  %v198 = vmul.f32 %v131, %v169
  %v199 = vmul.f32 %v132, %v169
  %v200 = vmul.f32 %v133, %v169
  %v201 = vmul.f32 %v134, %v169
  %v202 = vmul.f32 %v135, %v169
  %v203 = vmul.f32 %v136, %v169
  %v204 = vmul.f32 %v137, %v169
  %v205 = vmul.f32 %v138, %v169
  %v206 = vmul.f32 %v139, %v169
  %v207 = vmul.f32 %v140, %v169
  %v208 = vmul.f32 %v141, %v169
  %v209 = vmul.f32 %v142, %v169
  %v210 = vmul.f32 %v143, %v169
  %v211 = vmul.f32 %v144, %v169
  %v212 = vmul.f32 %v145, %v169
  %v213 = vmul.f32 %v146, %v169
  %v214 = vmul.f32 %v147, %v169
  %v215 = vmul.f32 %v148, %v169
  %v216 = vmul.f32 %v149, %v169
  %v217 = vmul.f32 %v150, %v169
  %v218 = vmul.f32 %v151, %v169
  %v219 = vmul.f32 %v152, %v169
  %v220 = vmul.f32 %v153, %v169
  %v221 = vmul.f32 %v154, %v169
  %v222 = vmul.f32 %v155, %v169
  %v223 = vmul.f32 %v156, %v169
  %v224 = vmul.f32 %v157, %v169
  %v225 = vmul.f32 %v158, %v169
  %v226 = vmul.f32 %v159, %v169
  %v227 = vmul.f32 %v160, %v169
  %v228 = vmul.f32 %v161, %v169
  %v229 = vmul.f32 %v162, %v169
  %v230 = vmul.f32 %v163, %v169
  %v231 = vmul.f32 %v164, %v169
  %v232 = vmul.f32 %v165, %v169
  %v233 = vmul.f32 %v166, %v169
  %v234 = vmul.f32 %v167, %v169
  %v236 = vperm.slane %v39, 0
  %v238 = vadd.f32 %v171, %v236
  %v239 = vadd.f32 %v172, %v236
  %v240 = vadd.f32 %v173, %v236
  %v241 = vadd.f32 %v174, %v236
  %v242 = vadd.f32 %v175, %v236
  %v243 = vadd.f32 %v176, %v236
  %v244 = vadd.f32 %v177, %v236
  %v245 = vadd.f32 %v178, %v236
  %v246 = vadd.f32 %v179, %v236
  %v247 = vadd.f32 %v180, %v236
  %v248 = vadd.f32 %v181, %v236
  %v249 = vadd.f32 %v182, %v236
  %v250 = vadd.f32 %v183, %v236
  %v251 = vadd.f32 %v184, %v236
  %v252 = vadd.f32 %v185, %v236
  %v253 = vadd.f32 %v186, %v236
  %v254 = vadd.f32 %v187, %v236
  %v255 = vadd.f32 %v188, %v236
  %v256 = vadd.f32 %v189, %v236
  %v257 = vadd.f32 %v190, %v236
  %v258 = vadd.f32 %v191, %v236
  %v259 = vadd.f32 %v192, %v236
  %v260 = vadd.f32 %v193, %v236
  %v261 = vadd.f32 %v194, %v236
  %v262 = vadd.f32 %v195, %v236
  %v263 = vadd.f32 %v196, %v236
  %v264 = vadd.f32 %v197, %v236
  %v265 = vadd.f32 %v198, %v236
  %v266 = vadd.f32 %v199, %v236
  %v267 = vadd.f32 %v200, %v236
  %v268 = vadd.f32 %v201, %v236
  %v269 = vadd.f32 %v202, %v236
  %v270 = vadd.f32 %v203, %v236
  %v271 = vadd.f32 %v204, %v236
  %v272 = vadd.f32 %v205, %v236
  %v273 = vadd.f32 %v206, %v236
  %v274 = vadd.f32 %v207, %v236
  %v275 = vadd.f32 %v208, %v236
  %v276 = vadd.f32 %v209, %v236
  %v277 = vadd.f32 %v210, %v236
  %v278 = vadd.f32 %v211, %v236
  %v279 = vadd.f32 %v212, %v236
  %v280 = vadd.f32 %v213, %v236
  %v281 = vadd.f32 %v214, %v236
  %v282 = vadd.f32 %v215, %v236
  %v283 = vadd.f32 %v216, %v236
  %v284 = vadd.f32 %v217, %v236
  %v285 = vadd.f32 %v218, %v236
  %v286 = vadd.f32 %v219, %v236
  %v287 = vadd.f32 %v220, %v236
  %v288 = vadd.f32 %v221, %v236
  %v289 = vadd.f32 %v222, %v236
  %v290 = vadd.f32 %v223, %v236
  %v291 = vadd.f32 %v224, %v236
  %v292 = vadd.f32 %v225, %v236
  %v293 = vadd.f32 %v226, %v236
  %v294 = vadd.f32 %v227, %v236
  %v295 = vadd.f32 %v228, %v236
  %v296 = vadd.f32 %v229, %v236
  %v297 = vadd.f32 %v230, %v236
  %v298 = vadd.f32 %v231, %v236
  %v299 = vadd.f32 %v232, %v236
  %v300 = vadd.f32 %v233, %v236
  %v301 = vadd.f32 %v234, %v236
  %v302 = vmax.f32 %v238, 0.0
  %v303 = vmax.f32 %v239, 0.0
  %v304 = vmax.f32 %v240, 0.0
  %v305 = vmax.f32 %v241, 0.0
  %v306 = vmax.f32 %v242, 0.0
  %v307 = vmax.f32 %v243, 0.0
  %v308 = vmax.f32 %v244, 0.0
  %v309 = vmax.f32 %v245, 0.0
  %v310 = vmax.f32 %v246, 0.0
  %v311 = vmax.f32 %v247, 0.0
  %v312 = vmax.f32 %v248, 0.0
  %v313 = vmax.f32 %v249, 0.0
  %v314 = vmax.f32 %v250, 0.0
  %v315 = vmax.f32 %v251, 0.0
  %v316 = vmax.f32 %v252, 0.0
  %v317 = vmax.f32 %v253, 0.0
  %v318 = vmax.f32 %v254, 0.0
  %v319 = vmax.f32 %v255, 0.0
  %v320 = vmax.f32 %v256, 0.0
  %v321 = vmax.f32 %v257, 0.0
  %v322 = vmax.f32 %v258, 0.0
  %v323 = vmax.f32 %v259, 0.0
  %v324 = vmax.f32 %v260, 0.0
  %v325 = vmax.f32 %v261, 0.0
  %v326 = vmax.f32 %v262, 0.0
  %v327 = vmax.f32 %v263, 0.0
  %v328 = vmax.f32 %v264, 0.0
  %v329 = vmax.f32 %v265, 0.0
  %v330 = vmax.f32 %v266, 0.0
  %v331 = vmax.f32 %v267, 0.0
  %v332 = vmax.f32 %v268, 0.0
  %v333 = vmax.f32 %v269, 0.0
  %v334 = vmax.f32 %v270, 0.0
  %v335 = vmax.f32 %v271, 0.0
  %v336 = vmax.f32 %v272, 0.0
  %v337 = vmax.f32 %v273, 0.0
  %v338 = vmax.f32 %v274, 0.0
  %v339 = vmax.f32 %v275, 0.0
  %v340 = vmax.f32 %v276, 0.0
  %v341 = vmax.f32 %v277, 0.0
  %v342 = vmax.f32 %v278, 0.0
  %v343 = vmax.f32 %v279, 0.0
  %v344 = vmax.f32 %v280, 0.0
  %v345 = vmax.f32 %v281, 0.0
  %v346 = vmax.f32 %v282, 0.0
  %v347 = vmax.f32 %v283, 0.0
  %v348 = vmax.f32 %v284, 0.0
  %v349 = vmax.f32 %v285, 0.0
  %v350 = vmax.f32 %v286, 0.0
  %v351 = vmax.f32 %v287, 0.0
  %v352 = vmax.f32 %v288, 0.0
  %v353 = vmax.f32 %v289, 0.0
  %v354 = vmax.f32 %v290, 0.0
  %v355 = vmax.f32 %v291, 0.0
  %v356 = vmax.f32 %v292, 0.0
  %v357 = vmax.f32 %v293, 0.0
  %v358 = vmax.f32 %v294, 0.0
  %v359 = vmax.f32 %v295, 0.0
  %v360 = vmax.f32 %v296, 0.0
  %v361 = vmax.f32 %v297, 0.0
  %v362 = vmax.f32 %v298, 0.0
  %v363 = vmax.f32 %v299, 0.0
  %v364 = vmax.f32 %v300, 0.0
  %v365 = vmax.f32 %v301, 0.0
  %366 = vst [vmem:[%s4] sm:$0xff] %v302
  %367 = vst [vmem:[%s4 + $0x8] sm:$0xff] %v303
  %368 = vst [vmem:[%s4 + $0x10] sm:$0xff] %v304
  %369 = vst [vmem:[%s4 + $0x18] sm:$0xff] %v305
  %370 = vst [vmem:[%s4 + $0x20] sm:$0xff] %v306
  %371 = vst [vmem:[%s4 + $0x28] sm:$0xff] %v307
  %372 = vst [vmem:[%s4 + $0x30] sm:$0xff] %v308
  %373 = vst [vmem:[%s4 + $0x38] sm:$0xff] %v309
  %374 = vst [vmem:[%s4 + $0x40] sm:$0xff] %v310
  %375 = vst [vmem:[%s4 + $0x48] sm:$0xff] %v311
  %376 = vst [vmem:[%s4 + $0x50] sm:$0xff] %v312
  %377 = vst [vmem:[%s4 + $0x58] sm:$0xff] %v313
  %378 = vst [vmem:[%s4 + $0x60] sm:$0xff] %v314
  %379 = vst [vmem:[%s4 + $0x68] sm:$0xff] %v315
  %380 = vst [vmem:[%s4 + $0x70] sm:$0xff] %v316
  %381 = vst [vmem:[%s4 + $0x78] sm:$0xff] %v317
  %382 = vst [vmem:[%s4 + $0x80] sm:$0xff] %v318
  %383 = vst [vmem:[%s4 + $0x88] sm:$0xff] %v319
  %384 = vst [vmem:[%s4 + $0x90] sm:$0xff] %v320
  %385 = vst [vmem:[%s4 + $0x98] sm:$0xff] %v321
  %386 = vst [vmem:[%s4 + $0xa0] sm:$0xff] %v322
  %387 = vst [vmem:[%s4 + $0xa8] sm:$0xff] %v323
  %388 = vst [vmem:[%s4 + $0xb0] sm:$0xff] %v324
  %389 = vst [vmem:[%s4 + $0xb8] sm:$0xff] %v325
  %390 = vst [vmem:[%s4 + $0xc0] sm:$0xff] %v326
  %391 = vst [vmem:[%s4 + $0xc8] sm:$0xff] %v327
  %392 = vst [vmem:[%s4 + $0xd0] sm:$0xff] %v328
  %393 = vst [vmem:[%s4 + $0xd8] sm:$0xff] %v329
  %394 = vst [vmem:[%s4 + $0xe0] sm:$0xff] %v330
  %395 = vst [vmem:[%s4 + $0xe8] sm:$0xff] %v331
  %396 = vst [vmem:[%s4 + $0xf0] sm:$0xff] %v332
  %397 = vst [vmem:[%s4 + $0xf8] sm:$0xff] %v333
  %398 = vst [vmem:[%s4 + $0x100] sm:$0xff] %v334
  %399 = vst [vmem:[%s4 + $0x108] sm:$0xff] %v335
  %400 = vst [vmem:[%s4 + $0x110] sm:$0xff] %v336
  %401 = vst [vmem:[%s4 + $0x118] sm:$0xff] %v337
  %402 = vst [vmem:[%s4 + $0x120] sm:$0xff] %v338
  %403 = vst [vmem:[%s4 + $0x128] sm:$0xff] %v339
  %404 = vst [vmem:[%s4 + $0x130] sm:$0xff] %v340
  %405 = vst [vmem:[%s4 + $0x138] sm:$0xff] %v341
  %406 = vst [vmem:[%s4 + $0x140] sm:$0xff] %v342
  %407 = vst [vmem:[%s4 + $0x148] sm:$0xff] %v343
  %408 = vst [vmem:[%s4 + $0x150] sm:$0xff] %v344
  %409 = vst [vmem:[%s4 + $0x158] sm:$0xff] %v345
  %410 = vst [vmem:[%s4 + $0x160] sm:$0xff] %v346
  %411 = vst [vmem:[%s4 + $0x168] sm:$0xff] %v347
  %412 = vst [vmem:[%s4 + $0x170] sm:$0xff] %v348
  %413 = vst [vmem:[%s4 + $0x178] sm:$0xff] %v349
  %414 = vst [vmem:[%s4 + $0x180] sm:$0xff] %v350
  %415 = vst [vmem:[%s4 + $0x188] sm:$0xff] %v351
  %416 = vst [vmem:[%s4 + $0x190] sm:$0xff] %v352
  %417 = vst [vmem:[%s4 + $0x198] sm:$0xff] %v353
  %418 = vst [vmem:[%s4 + $0x1a0] sm:$0xff] %v354
  %419 = vst [vmem:[%s4 + $0x1a8] sm:$0xff] %v355
  %420 = vst [vmem:[%s4 + $0x1b0] sm:$0xff] %v356
  %421 = vst [vmem:[%s4 + $0x1b8] sm:$0xff] %v357
  %422 = vst [vmem:[%s4 + $0x1c0] sm:$0xff] %v358
  %423 = vst [vmem:[%s4 + $0x1c8] sm:$0xff] %v359
  %424 = vst [vmem:[%s4 + $0x1d0] sm:$0xff] %v360
  %425 = vst [vmem:[%s4 + $0x1d8] sm:$0xff] %v361
  %426 = vst [vmem:[%s4 + $0x1e0] sm:$0xff] %v362
  %427 = vst [vmem:[%s4 + $0x1e8] sm:$0xff] %v363
  %428 = vst [vmem:[%s4 + $0x1f0] sm:$0xff] %v364
  %429 = vst [vmem:[%s4 + $0x1f8] sm:$0xff] %v365
  // Predicated region
  $region18: #{conv_block_forward.3} parent=0 // pred_check
    _
  $region19: #{conv_block_forward.3} parent=0 // pred_check_branch
    %431 = sbr.rel (0) target = $region21
  $region20: #{conv_block_forward.3} parent=0 // pred_region
    _
  $region21: #{conv_block_forward.3} parent=0 // pred_fallthru
    _
  // Predicated region
  $region22: #{conv_block_forward.3} parent=0 // pred_check
    _
  $region23: #{conv_block_forward.3} parent=0 // pred_check_branch
    %433 = sbr.rel (0) target = $region25
  $region24: #{conv_block_forward.3} parent=0 // pred_region
    _
  $region25: #{conv_block_forward.3} parent=0 // pred_fallthru
    _

// kernel: conv_block_forward.2
$region0: #{conv_block_forward.2}
  #allocation0 [shape = 'u32[]', space=smem, size = 0x4, offset = 0x4, fixed_abs, tag = 'smem constant byte address 0x4 - core index']
  #allocation1 [shape = 'u32[72,128]{1,0:T(1,128)}', space=vmem, size = 0x9000, scoped, tag = 'internal scratch']
  %s0 = inlined_call_operand.vmem [shape: bf16[2,18,18,4], index: 0, kind: input, shape index: {}]
  %s1 = inlined_call_operand.vmem [shape: bf16[36,128], index: 1, kind: input, shape index: {}]
  %s2 = inlined_call_operand.vmem [shape: bf16[512,128], index: 2, kind: output, shape index: {0}]
  %s3 = inlined_call_operand.vmem [shape: f32[2,2,128], index: 3, kind: output, shape index: {1}]
  %4 = xla_tuple %s2, %s3
  %s5 = sld [smem:[#allocation0]]
  $region49: #{conv_block_forward.2} parent=0
    _
  %s7 = ssub.s32 1, %s5
  %s8 = scalar_select 0, %s7, %s5
  loop: start=0, step=1, limit=4
  $region2: #{conv_block_forward.2} parent=0 // loop_pre_header
    _
  $region3: #{conv_block_forward.2} parent=0 // loop_header
    %s10 = sphi 0, %s14
    %p11 = scmp.ge.s32.totalorder %s10, 4
    %s20 = sphi 0, %s22
    %s23 = sphi 0, %s20
    %s24 = sphi 0, %s23
    %s40 = sphi 0, %s24
    %s44 = sphi 0, %s44
    %s46 = sphi 0, %s44
    %s47 = sphi 0, %s46
    %s61 = sphi 0, %s47
    %s67 = sphi 0, %s69
    %s70 = sphi 0, %s67
    %s71 = sphi 0, %s70
    %s87 = sphi 0, %s71
    %s93 = sphi 0, %s95
    %s96 = sphi 0, %s93
    %s97 = sphi 0, %s96
    %s113 = sphi 0, %s97
  $region4: #{conv_block_forward.2} parent=0 // loop_header_branch
    %13 = sbr.rel (%p11) target = $region8
  $region5: #{conv_block_forward.2} parent=0 // loop_body
    %s15 = ssub.s32 %s10, 1
    %s16 = ssub.s32 %s10, 2
    %s17 = sadd.s32 %s10, 1
    %s18 = ssub.s32 %s10, %s17
    %p19 = scmp.eq.s32.totalorder %s18, 0
    %s21 = sadd.s32 %s20, 1
    %s22 = scalar_select %p19, %s20, %s21
    %p25 = pneg %p19
    %p26 = scmp.eq.s32.totalorder %s10, 1
    %p27 = por %p25, %p26
    %p28 = scmp.ne.s32.totalorder %s20, %s23
    %p29 = scmp.eq.s32.totalorder %s10, 0
    %p30 = por %p28, %p29
    %p31 = scmp.ne.s32.totalorder %s20, %s23
    %p32 = scmp.eq.s32.totalorder %s15, 1
    %p33 = por %p31, %p32
    %p34 = scmp.ne.s32.totalorder %s23, %s24
    %p35 = scmp.eq.s32.totalorder %s15, 0
    %p36 = por %p34, %p35
    %p37 = scmp.ne.s32.totalorder %s23, %s24
    %p38 = scmp.eq.s32.totalorder %s16, 1
    %p39 = por %p37, %p38
    %p41 = scmp.ne.s32.totalorder %s24, %s40
    %p42 = scmp.eq.s32.totalorder %s16, 0
    %p43 = por %p41, %p42
    %s45 = sadd.s32 %s44, 1
    %p48 = scmp.eq.s32.totalorder %s10, 1
    %p49 = scmp.ne.s32.totalorder %s44, %s46
    %p50 = scmp.eq.s32.totalorder %s10, 0
    %p51 = por %p49, %p50
    %p52 = scmp.ne.s32.totalorder %s44, %s46
    %p53 = scmp.eq.s32.totalorder %s15, 1
    %p54 = por %p52, %p53
    %p55 = scmp.ne.s32.totalorder %s46, %s47
    %p56 = scmp.eq.s32.totalorder %s15, 0
    %p57 = por %p55, %p56
    %p58 = scmp.ne.s32.totalorder %s46, %s47
    %p59 = scmp.eq.s32.totalorder %s16, 1
    %p60 = por %p58, %p59
    %p62 = scmp.ne.s32.totalorder %s47, %s61
    %p63 = scmp.eq.s32.totalorder %s16, 0
    %p64 = por %p62, %p63
    %s65 = ssub.s32 %s10, %s17
    %p66 = scmp.eq.s32.totalorder %s65, 0
    %s68 = sadd.s32 %s67, 1
    %s69 = scalar_select %p66, %s67, %s68
    %p72 = pneg %p66
    %p73 = scmp.eq.s32.totalorder %s10, 1
    %p74 = por %p72, %p73
    %p75 = scmp.ne.s32.totalorder %s67, %s70
    %p76 = scmp.eq.s32.totalorder %s10, 0
    %p77 = por %p75, %p76
    %p78 = scmp.ne.s32.totalorder %s67, %s70
    %p79 = scmp.eq.s32.totalorder %s15, 1
    %p80 = por %p78, %p79
    %p81 = scmp.ne.s32.totalorder %s70, %s71
    %p82 = scmp.eq.s32.totalorder %s15, 0
    %p83 = por %p81, %p82
    %p84 = scmp.ne.s32.totalorder %s70, %s71
    %p85 = scmp.eq.s32.totalorder %s16, 1
    %p86 = por %p84, %p85
    %p88 = scmp.ne.s32.totalorder %s71, %s87
    %p89 = scmp.eq.s32.totalorder %s16, 0
    %p90 = por %p88, %p89
    %s91 = ssub.s32 %s10, %s17
    %p92 = scmp.eq.s32.totalorder %s91, 0
    %s94 = sadd.s32 %s93, 1
    %s95 = scalar_select %p92, %s93, %s94
    %p98 = pneg %p92
    %p99 = scmp.eq.s32.totalorder %s10, 1
    %p100 = por %p98, %p99
    %p101 = scmp.ne.s32.totalorder %s93, %s96
    %p102 = scmp.eq.s32.totalorder %s10, 0
    %p103 = por %p101, %p102
    %p104 = scmp.ne.s32.totalorder %s93, %s96
    %p105 = scmp.eq.s32.totalorder %s15, 1
    %p106 = por %p104, %p105
    %p107 = scmp.ne.s32.totalorder %s96, %s97
    %p108 = scmp.eq.s32.totalorder %s15, 0
    %p109 = por %p107, %p108
    %p110 = scmp.ne.s32.totalorder %s96, %s97
    %p111 = scmp.eq.s32.totalorder %s16, 1
    %p112 = por %p110, %p111
    %p114 = scmp.ne.s32.totalorder %s97, %s113
    %p115 = scmp.eq.s32.totalorder %s16, 0
    %p116 = por %p114, %p115
    %p117 = scmp.le.s32.totalorder 1, %s10
    %p118 = scmp.lt.s32.totalorder %s10, 3
    %p119 = pnand %p117, %p118
    %p120 = pneg %p119
    // Predicated region
    $region9: #{conv_block_forward.2} parent=5 // pred_check
      _
    $region10: #{conv_block_forward.2} parent=5 // pred_check_branch
      %122 = sbr.rel (%p119) target = $region12
    $region11: #{conv_block_forward.2} parent=5 // pred_region
      %s123 = ssub.s32 %s10, 1
      // Predicated region
      $region13: #{conv_block_forward.2} parent=11 // pred_check
        %p124 = pneg %p57
      $region14: #{conv_block_forward.2} parent=11 // pred_check_branch
        %126 = sbr.rel (%p124) target = $region16
      $region15: #{conv_block_forward.2} parent=11 // pred_region
        _
      $region16: #{conv_block_forward.2} parent=11 // pred_fallthru
        _
    $region12: #{conv_block_forward.2} parent=5 // pred_fallthru
      _
    %p127 = scmp.lt.s32.totalorder %s10, 2
    // Predicated region
    $region17: #{conv_block_forward.2} parent=5 // pred_check
      %p128 = pneg %p127
    $region18: #{conv_block_forward.2} parent=5 // pred_check_branch
      %130 = sbr.rel (%p128) target = $region20
    $region19: #{conv_block_forward.2} parent=5 // pred_region
      // Predicated region
      $region21: #{conv_block_forward.2} parent=19 // pred_check
        %p131 = pneg %p30
      $region22: #{conv_block_forward.2} parent=19 // pred_check_branch
        %133 = sbr.rel (%p131) target = $region24
      $region23: #{conv_block_forward.2} parent=19 // pred_region
        %p134 = scmp.lt.s32.totalorder %s10, 1
        %s135 = scalar_select %p134, %s10, 1
        %s136 = smul.addr %s135, 54
        %s137 = smul.addr %s136, 4
        %s138 = scalar_lea.vmem %s0, %s137
      $region24: #{conv_block_forward.2} parent=19 // pred_fallthru
        _
    $region20: #{conv_block_forward.2} parent=5 // pred_fallthru
      _
    %p139 = scmp.le.s32.totalorder 1, %s10
    %p140 = scmp.lt.s32.totalorder %s10, 3
    %p141 = pnand %p139, %p140
    %p142 = pneg %p141
    // Predicated region
    $region25: #{conv_block_forward.2} parent=5 // pred_check
      _
    $region26: #{conv_block_forward.2} parent=5 // pred_check_branch
      %144 = sbr.rel (%p141) target = $region28
    $region27: #{conv_block_forward.2} parent=5 // pred_region
      %s145 = ssub.s32 %s10, 1
      %p146 = scmp.lt.s32.totalorder %s15, 1
      %s147 = scalar_select %p146, %s15, 1
      %s148 = smul.addr %s147, 54
      %s149 = smul.addr %s148, 4
      %s150 = scalar_lea.vmem %s0, %s149
      %p151 = pneg %p36
      %p152 = pneg %p33
      %p153 = pneg %p57
      %p154 = pneg %p54
      %p155 = pneg %p83
      %p156 = pneg %p80
      %s157 = smul.u32 32, %s15
      %p158 = scmp.lt.s32.totalorder %s157, 63
      %s159 = scalar_select %p158, %s157, 63
      %s160 = smul.addr %s159, 4
      %s161 = scalar_lea.vmem %s2, %s160
      %p162 = pneg %p109
      %p163 = pneg %p106
      %p164 = scmp.lt.s32.totalorder %s15, 1
      %s165 = scalar_select %p164, %s15, 1
      %s166 = smul.addr %s165, 2
      %s167 = scalar_lea.vmem %s3, %s166
      %p168 = scmp.lt.s32.totalorder %s15, 1
      %s169 = scalar_select %p168, %s15, 1
      %s170 = smul.addr %s169, 54
      %s171 = smul.addr %s170, 4
      %s172 = scalar_lea.vmem %s0, %s171
      %s173 = smul.u32 32, %s15
      %p174 = scmp.lt.s32.totalorder %s173, 63
      %s175 = scalar_select %p174, %s173, 63
      %s176 = smul.addr %s175, 4
      %s177 = scalar_lea.vmem %s2, %s176
      %s178 = smul.u32 32, %s15
      %p179 = scmp.lt.s32.totalorder %s15, 1
      %s180 = scalar_select %p179, %s15, 1
      %s181 = smul.addr %s180, 2
      %s182 = scalar_lea.vmem %s3, %s181
      %v184 = vld [vmem:[%s172] sm:$0xf]
      %v185 = vld [vmem:[%s172 + $0x4] sm:$0xf]
      %v186 = vld [vmem:[%s172 + $0x8] sm:$0x1]
      %v187 = vld [vmem:[%s172 + $0xc] sm:$0xf]
      %v188 = vld [vmem:[%s172 + $0x10] sm:$0xf]
      %v189 = vld [vmem:[%s172 + $0x14] sm:$0x1]
      %v190 = vld [vmem:[%s172 + $0x18] sm:$0xf]
      %v191 = vld [vmem:[%s172 + $0x1c] sm:$0xf]
      %v192 = vld [vmem:[%s172 + $0x20] sm:$0x1]
      %v193 = vld [vmem:[%s172 + $0x24] sm:$0xf]
      %v194 = vld [vmem:[%s172 + $0x28] sm:$0xf]
      %v195 = vld [vmem:[%s172 + $0x2c] sm:$0x1]
      %v196 = vld [vmem:[%s172 + $0x30] sm:$0xf]
      %v197 = vld [vmem:[%s172 + $0x34] sm:$0xf]
      %v198 = vld [vmem:[%s172 + $0x38] sm:$0x1]
      %v199 = vld [vmem:[%s172 + $0x3c] sm:$0xf]
      %v200 = vld [vmem:[%s172 + $0x40] sm:$0xf]
      %v201 = vld [vmem:[%s172 + $0x44] sm:$0x1]
      %v202 = vld [vmem:[%s172 + $0x48] sm:$0xf]
      %v203 = vld [vmem:[%s172 + $0x4c] sm:$0xf]
      %v204 = vld [vmem:[%s172 + $0x50] sm:$0x1]
      %v205 = vld [vmem:[%s172 + $0x54] sm:$0xf]
      %v206 = vld [vmem:[%s172 + $0x58] sm:$0xf]
      %v207 = vld [vmem:[%s172 + $0x5c] sm:$0x1]
      %v208 = vld [vmem:[%s172 + $0x60] sm:$0xf]
      %v209 = vld [vmem:[%s172 + $0x64] sm:$0xf]
      %v210 = vld [vmem:[%s172 + $0x68] sm:$0x1]
      %v211 = vld [vmem:[%s172 + $0x6c] sm:$0xf]
      %v212 = vld [vmem:[%s172 + $0x70] sm:$0xf]
      %v213 = vld [vmem:[%s172 + $0x74] sm:$0x1]
      %v214 = vld [vmem:[%s172 + $0x78] sm:$0xf]
      %v215 = vld [vmem:[%s172 + $0x7c] sm:$0xf]
      %v216 = vld [vmem:[%s172 + $0x80] sm:$0x1]
      %v217 = vld [vmem:[%s172 + $0x84] sm:$0xf]
      %v218 = vld [vmem:[%s172 + $0x88] sm:$0xf]
      %v219 = vld [vmem:[%s172 + $0x8c] sm:$0x1]
      %v220 = vld [vmem:[%s172 + $0x90] sm:$0xf]
      %v221 = vld [vmem:[%s172 + $0x94] sm:$0xf]
      %v222 = vld [vmem:[%s172 + $0x98] sm:$0x1]
      %v223 = vld [vmem:[%s172 + $0x9c] sm:$0xf]
      %v224 = vld [vmem:[%s172 + $0xa0] sm:$0xf]
      %v225 = vld [vmem:[%s172 + $0xa4] sm:$0x1]
      %v226 = vld [vmem:[%s172 + $0xa8] sm:$0xf]
      %v227 = vld [vmem:[%s172 + $0xac] sm:$0xf]
      %v228 = vld [vmem:[%s172 + $0xb0] sm:$0x1]
      %v229 = vld [vmem:[%s172 + $0xb4] sm:$0xf]
      %v230 = vld [vmem:[%s172 + $0xb8] sm:$0xf]
      %v231 = vld [vmem:[%s172 + $0xbc] sm:$0x1]
      %v232 = vld [vmem:[%s172 + $0xc0] sm:$0xf]
      %v233 = vld [vmem:[%s172 + $0xc4] sm:$0xf]
      %v234 = vld [vmem:[%s172 + $0xc8] sm:$0x1]
      %v235 = vld [vmem:[%s172 + $0xcc] sm:$0xf]
      %v236 = vld [vmem:[%s172 + $0xd0] sm:$0xf]
      %v237 = vld [vmem:[%s172 + $0xd4] sm:$0x1]
      %v270 = vunpack.c.l.b16 %v184
      %v271 = vunpack.c.l.b16 %v185
      %v272 = vunpack.c.l.b16 %v187
      %v273 = vunpack.c.l.b16 %v188
      %v274 = vunpack.c.l.b16 %v190
      %v275 = vunpack.c.l.b16 %v191
      %v276 = vunpack.c.l.b16 %v193
      %v277 = vunpack.c.l.b16 %v194
      %v278 = vunpack.c.l.b16 %v196
      %v279 = vunpack.c.l.b16 %v197
      %v280 = vunpack.c.l.b16 %v199
      %v281 = vunpack.c.l.b16 %v200
      %v282 = vunpack.c.l.b16 %v202
      %v283 = vunpack.c.l.b16 %v203
      %v284 = vunpack.c.l.b16 %v205
      %v285 = vunpack.c.l.b16 %v206
      %v286 = vunpack.c.l.b16 %v208
      %v287 = vunpack.c.l.b16 %v209
      %v288 = vunpack.c.l.b16 %v211
      %v289 = vunpack.c.l.b16 %v212
      %v290 = vunpack.c.l.b16 %v214
      %v291 = vunpack.c.l.b16 %v215
      %v292 = vunpack.c.l.b16 %v217
      %v293 = vunpack.c.l.b16 %v218
      %v294 = vunpack.c.l.b16 %v220
      %v295 = vunpack.c.l.b16 %v221
      %v296 = vunpack.c.l.b16 %v223
      %v297 = vunpack.c.l.b16 %v224
      %v298 = vunpack.c.l.b16 %v226
      %v299 = vunpack.c.l.b16 %v227
      %v300 = vunpack.c.l.b16 %v229
      %v301 = vunpack.c.l.b16 %v230
      %v302 = vpack.c.b16 %v271, %v270
      %v303 = vpack.c.b16 %v273, %v272
      %v304 = vpack.c.b16 %v275, %v274
      %v305 = vpack.c.b16 %v277, %v276
      %v306 = vpack.c.b16 %v279, %v278
      %v307 = vpack.c.b16 %v281, %v280
      %v308 = vpack.c.b16 %v283, %v282
      %v309 = vpack.c.b16 %v285, %v284
      %v310 = vpack.c.b16 %v287, %v286
      %v311 = vpack.c.b16 %v289, %v288
      %v312 = vpack.c.b16 %v291, %v290
      %v313 = vpack.c.b16 %v293, %v292
      %v314 = vpack.c.b16 %v295, %v294
      %v315 = vpack.c.b16 %v297, %v296
      %v316 = vpack.c.b16 %v299, %v298
      %v317 = vpack.c.b16 %v301, %v300
      %v334 = vunpack.c.l.b16 %v186
      %v335 = vunpack.c.l.b16 %v189
      %v336 = vunpack.c.l.b16 %v192
      %v337 = vunpack.c.l.b16 %v195
      %v338 = vunpack.c.l.b16 %v198
      %v339 = vunpack.c.l.b16 %v201
      %v340 = vunpack.c.l.b16 %v204
      %v341 = vunpack.c.l.b16 %v207
      %v342 = vunpack.c.l.b16 %v210
      %v343 = vunpack.c.l.b16 %v213
      %v344 = vunpack.c.l.b16 %v216
      %v345 = vunpack.c.l.b16 %v219
      %v346 = vunpack.c.l.b16 %v222
      %v347 = vunpack.c.l.b16 %v225
      %v348 = vunpack.c.l.b16 %v228
      %v349 = vunpack.c.l.b16 %v231
      %v350 = vpack.c.b16 %v334, %v334
      %v351 = vpack.c.b16 %v335, %v335
      %v352 = vpack.c.b16 %v336, %v336
      %v353 = vpack.c.b16 %v337, %v337
      %v354 = vpack.c.b16 %v338, %v338
      %v355 = vpack.c.b16 %v339, %v339
      %v356 = vpack.c.b16 %v340, %v340
      %v357 = vpack.c.b16 %v341, %v341
      %v358 = vpack.c.b16 %v342, %v342
      %v359 = vpack.c.b16 %v343, %v343
      %v360 = vpack.c.b16 %v344, %v344
      %v361 = vpack.c.b16 %v345, %v345
      %v362 = vpack.c.b16 %v346, %v346
      %v363 = vpack.c.b16 %v347, %v347
      %v364 = vpack.c.b16 %v348, %v348
      %v365 = vpack.c.b16 %v349, %v349
      %vm366 = vsmask.f32 7424
      %v368 = vshrl.u32 %v302, 16
      %v370 = vshll.u32 %v302, 16
      %v372 = vrot.slane %v370, 1
      %v373 = vor.u32 %v368, %v372
      %v375 = vshll.u32 %v350, 16
      %v377 = vrot.slane %v375, 1
      %v378 = vsel %vm366, %v373, %v377
      %v380 = vshrl.u32 %v303, 16
      %v382 = vshll.u32 %v303, 16
      %v384 = vrot.slane %v382, 1
      %v385 = vor.u32 %v380, %v384
      %v387 = vshll.u32 %v351, 16
      %v389 = vrot.slane %v387, 1
      %v390 = vsel %vm366, %v385, %v389
      %v392 = vshrl.u32 %v304, 16
      %v394 = vshll.u32 %v304, 16
      %v396 = vrot.slane %v394, 1
      %v397 = vor.u32 %v392, %v396
      %v399 = vshll.u32 %v352, 16
      %v401 = vrot.slane %v399, 1
      %v402 = vsel %vm366, %v397, %v401
      %v404 = vshrl.u32 %v305, 16
      %v406 = vshll.u32 %v305, 16
      %v408 = vrot.slane %v406, 1
      %v409 = vor.u32 %v404, %v408
      %v411 = vshll.u32 %v353, 16
      %v413 = vrot.slane %v411, 1
      %v414 = vsel %vm366, %v409, %v413
      %v416 = vshrl.u32 %v306, 16
      %v418 = vshll.u32 %v306, 16
      %v420 = vrot.slane %v418, 1
      %v421 = vor.u32 %v416, %v420
      %v423 = vshll.u32 %v354, 16
      %v425 = vrot.slane %v423, 1
      %v426 = vsel %vm366, %v421, %v425
      %v428 = vshrl.u32 %v307, 16
      %v430 = vshll.u32 %v307, 16
      %v432 = vrot.slane %v430, 1
      %v433 = vor.u32 %v428, %v432
      %v435 = vshll.u32 %v355, 16
      %v437 = vrot.slane %v435, 1
      %v438 = vsel %vm366, %v433, %v437
      %v440 = vshrl.u32 %v308, 16
      %v442 = vshll.u32 %v308, 16
      %v444 = vrot.slane %v442, 1
      %v445 = vor.u32 %v440, %v444
      %v447 = vshll.u32 %v356, 16
      %v449 = vrot.slane %v447, 1
      %v450 = vsel %vm366, %v445, %v449
      %v452 = vshrl.u32 %v309, 16
      %v454 = vshll.u32 %v309, 16
      %v456 = vrot.slane %v454, 1
      %v457 = vor.u32 %v452, %v456
      %v459 = vshll.u32 %v357, 16
      %v461 = vrot.slane %v459, 1
      %v462 = vsel %vm366, %v457, %v461
      %v464 = vshrl.u32 %v310, 16
      %v466 = vshll.u32 %v310, 16
      %v468 = vrot.slane %v466, 1
      %v469 = vor.u32 %v464, %v468
      %v471 = vshll.u32 %v358, 16
      %v473 = vrot.slane %v471, 1
      %v474 = vsel %vm366, %v469, %v473
      %v476 = vshrl.u32 %v311, 16
      %v478 = vshll.u32 %v311, 16
      %v480 = vrot.slane %v478, 1
      %v481 = vor.u32 %v476, %v480
      %v483 = vshll.u32 %v359, 16
      %v485 = vrot.slane %v483, 1
      %v486 = vsel %vm366, %v481, %v485
      %v488 = vshrl.u32 %v312, 16
      %v490 = vshll.u32 %v312, 16
      %v492 = vrot.slane %v490, 1
      %v493 = vor.u32 %v488, %v492
      %v495 = vshll.u32 %v360, 16
      %v497 = vrot.slane %v495, 1
      %v498 = vsel %vm366, %v493, %v497
      %v500 = vshrl.u32 %v313, 16
      %v502 = vshll.u32 %v313, 16
      %v504 = vrot.slane %v502, 1
      %v505 = vor.u32 %v500, %v504
      %v507 = vshll.u32 %v361, 16
      %v509 = vrot.slane %v507, 1
      %v510 = vsel %vm366, %v505, %v509
      %v512 = vshrl.u32 %v314, 16
      %v514 = vshll.u32 %v314, 16
      %v516 = vrot.slane %v514, 1
      %v517 = vor.u32 %v512, %v516
      %v519 = vshll.u32 %v362, 16
      %v521 = vrot.slane %v519, 1
      %v522 = vsel %vm366, %v517, %v521
      %v524 = vshrl.u32 %v315, 16
      %v526 = vshll.u32 %v315, 16
      %v528 = vrot.slane %v526, 1
      %v529 = vor.u32 %v524, %v528
      %v531 = vshll.u32 %v363, 16
      %v533 = vrot.slane %v531, 1
      %v534 = vsel %vm366, %v529, %v533
      %v536 = vshrl.u32 %v316, 16
      %v538 = vshll.u32 %v316, 16
      %v540 = vrot.slane %v538, 1
      %v541 = vor.u32 %v536, %v540
      %v543 = vshll.u32 %v364, 16
      %v545 = vrot.slane %v543, 1
      %v546 = vsel %vm366, %v541, %v545
      %v548 = vshrl.u32 %v317, 16
      %v550 = vshll.u32 %v317, 16
      %v552 = vrot.slane %v550, 1
      %v553 = vor.u32 %v548, %v552
      %v555 = vshll.u32 %v365, 16
      %v557 = vrot.slane %v555, 1
      %v558 = vsel %vm366, %v553, %v557
      %559 = vrot.lane.b32.xlu0 %v378, 4
      %v560 = vpop.permute.xlu0 %559
      %561 = vrot.lane.b32.xlu0 %v390, 4
      %v562 = vpop.permute.xlu0 %561
      %563 = vrot.lane.b32.xlu0 %v402, 4
      %v564 = vpop.permute.xlu0 %563
      %565 = vrot.lane.b32.xlu0 %v414, 4
      %v566 = vpop.permute.xlu0 %565
      %567 = vrot.lane.b32.xlu0 %v426, 4
      %v568 = vpop.permute.xlu0 %567
      %569 = vrot.lane.b32.xlu0 %v438, 4
      %v570 = vpop.permute.xlu0 %569
      %571 = vrot.lane.b32.xlu0 %v450, 4
      %v572 = vpop.permute.xlu0 %571
      %573 = vrot.lane.b32.xlu0 %v462, 4
      %v574 = vpop.permute.xlu0 %573
      %575 = vrot.lane.b32.xlu0 %v474, 4
      %v576 = vpop.permute.xlu0 %575
      %577 = vrot.lane.b32.xlu0 %v486, 4
      %v578 = vpop.permute.xlu0 %577
      %579 = vrot.lane.b32.xlu0 %v498, 4
      %v580 = vpop.permute.xlu0 %579
      %581 = vrot.lane.b32.xlu0 %v510, 4
      %v582 = vpop.permute.xlu0 %581
      %583 = vrot.lane.b32.xlu0 %v522, 4
      %v584 = vpop.permute.xlu0 %583
      %585 = vrot.lane.b32.xlu0 %v534, 4
      %v586 = vpop.permute.xlu0 %585
      %587 = vrot.lane.b32.xlu0 %v546, 4
      %v588 = vpop.permute.xlu0 %587
      %589 = vrot.lane.b32.xlu0 %v558, 4
      %v590 = vpop.permute.xlu0 %589
      %vm591 = vcmask 1046528
      %v592 = vrot.slane %v302, 1
      %v593 = vrot.slane %v350, 1
      %v594 = vsel %vm591, %v592, %v593
      %v595 = vrot.slane %v303, 1
      %v596 = vrot.slane %v351, 1
      %v597 = vsel %vm591, %v595, %v596
      %v598 = vrot.slane %v304, 1
      %v599 = vrot.slane %v352, 1
      %v600 = vsel %vm591, %v598, %v599
      %v601 = vrot.slane %v305, 1
      %v602 = vrot.slane %v353, 1
      %v603 = vsel %vm591, %v601, %v602
      %v604 = vrot.slane %v306, 1
      %v605 = vrot.slane %v354, 1
      %v606 = vsel %vm591, %v604, %v605
      %v607 = vrot.slane %v307, 1
      %v608 = vrot.slane %v355, 1
      %v609 = vsel %vm591, %v607, %v608
      %v610 = vrot.slane %v308, 1
      %v611 = vrot.slane %v356, 1
      %v612 = vsel %vm591, %v610, %v611
      %v613 = vrot.slane %v309, 1
      %v614 = vrot.slane %v357, 1
      %v615 = vsel %vm591, %v613, %v614
      %v616 = vrot.slane %v310, 1
      %v617 = vrot.slane %v358, 1
      %v618 = vsel %vm591, %v616, %v617
      %v619 = vrot.slane %v311, 1
      %v620 = vrot.slane %v359, 1
      %v621 = vsel %vm591, %v619, %v620
      %v622 = vrot.slane %v312, 1
      %v623 = vrot.slane %v360, 1
      %v624 = vsel %vm591, %v622, %v623
      %v625 = vrot.slane %v313, 1
      %v626 = vrot.slane %v361, 1
      %v627 = vsel %vm591, %v625, %v626
      %v628 = vrot.slane %v314, 1
      %v629 = vrot.slane %v362, 1
      %v630 = vsel %vm591, %v628, %v629
      %v631 = vrot.slane %v315, 1
      %v632 = vrot.slane %v363, 1
      %v633 = vsel %vm591, %v631, %v632
      %v634 = vrot.slane %v316, 1
      %v635 = vrot.slane %v364, 1
      %v636 = vsel %vm591, %v634, %v635
      %v637 = vrot.slane %v317, 1
      %v638 = vrot.slane %v365, 1
      %v639 = vsel %vm591, %v637, %v638
      %640 = vrot.lane.b32.xlu0 %v594, 8
      %v641 = vpop.permute.xlu0 %640
      %642 = vrot.lane.b32.xlu0 %v597, 8
      %v643 = vpop.permute.xlu0 %642
      %644 = vrot.lane.b32.xlu0 %v600, 8
      %v645 = vpop.permute.xlu0 %644
      %646 = vrot.lane.b32.xlu0 %v603, 8
      %v647 = vpop.permute.xlu0 %646
      %648 = vrot.lane.b32.xlu0 %v606, 8
      %v649 = vpop.permute.xlu0 %648
      %650 = vrot.lane.b32.xlu0 %v609, 8
      %v651 = vpop.permute.xlu0 %650
      %652 = vrot.lane.b32.xlu0 %v612, 8
      %v653 = vpop.permute.xlu0 %652
      %654 = vrot.lane.b32.xlu0 %v615, 8
      %v655 = vpop.permute.xlu0 %654
      %656 = vrot.lane.b32.xlu0 %v618, 8
      %v657 = vpop.permute.xlu0 %656
      %658 = vrot.lane.b32.xlu0 %v621, 8
      %v659 = vpop.permute.xlu0 %658
      %660 = vrot.lane.b32.xlu0 %v624, 8
      %v661 = vpop.permute.xlu0 %660
      %662 = vrot.lane.b32.xlu0 %v627, 8
      %v663 = vpop.permute.xlu0 %662
      %664 = vrot.lane.b32.xlu0 %v630, 8
      %v665 = vpop.permute.xlu0 %664
      %666 = vrot.lane.b32.xlu0 %v633, 8
      %v667 = vpop.permute.xlu0 %666
      %668 = vrot.lane.b32.xlu0 %v636, 8
      %v669 = vpop.permute.xlu0 %668
      %670 = vrot.lane.b32.xlu0 %v639, 8
      %v671 = vpop.permute.xlu0 %670
      %v674 = vunpack.c.l.b16 %v232
      %v675 = vunpack.c.l.b16 %v233
      %v676 = vpack.c.b16 %v675, %v674
      %677 = vrot.lane.b32.xlu0 %v303, 12
      %v678 = vpop.permute.xlu0 %677
      %679 = vrot.lane.b32.xlu0 %v304, 12
      %v680 = vpop.permute.xlu0 %679
      %681 = vrot.lane.b32.xlu0 %v305, 12
      %v682 = vpop.permute.xlu0 %681
      %683 = vrot.lane.b32.xlu0 %v306, 12
      %v684 = vpop.permute.xlu0 %683
      %685 = vrot.lane.b32.xlu0 %v307, 12
      %v686 = vpop.permute.xlu0 %685
      %687 = vrot.lane.b32.xlu0 %v308, 12
      %v688 = vpop.permute.xlu0 %687
      %689 = vrot.lane.b32.xlu0 %v309, 12
      %v690 = vpop.permute.xlu0 %689
      %691 = vrot.lane.b32.xlu0 %v310, 12
      %v692 = vpop.permute.xlu0 %691
      %693 = vrot.lane.b32.xlu0 %v311, 12
      %v694 = vpop.permute.xlu0 %693
      %695 = vrot.lane.b32.xlu0 %v312, 12
      %v696 = vpop.permute.xlu0 %695
      %697 = vrot.lane.b32.xlu0 %v313, 12
      %v698 = vpop.permute.xlu0 %697
      %699 = vrot.lane.b32.xlu0 %v314, 12
      %v700 = vpop.permute.xlu0 %699
      %701 = vrot.lane.b32.xlu0 %v315, 12
      %v702 = vpop.permute.xlu0 %701
      %703 = vrot.lane.b32.xlu0 %v316, 12
      %v704 = vpop.permute.xlu0 %703
      %705 = vrot.lane.b32.xlu0 %v317, 12
      %v706 = vpop.permute.xlu0 %705
      %707 = vrot.lane.b32.xlu0 %v676, 12
      %v708 = vpop.permute.xlu0 %707
      %v710 = vunpack.c.l.b16 %v234
      %v711 = vpack.c.b16 %v710, %v710
      %v713 = vshrl.u32 %v676, 16
      %v715 = vshll.u32 %v676, 16
      %v717 = vrot.slane %v715, 1
      %v718 = vor.u32 %v713, %v717
      %v720 = vshll.u32 %v711, 16
      %v722 = vrot.slane %v720, 1
      %v723 = vsel %vm366, %v718, %v722
      %724 = vrot.lane.b32.xlu0 %v390, 16
      %v725 = vpop.permute.xlu0 %724
      %726 = vrot.lane.b32.xlu0 %v402, 16
      %v727 = vpop.permute.xlu0 %726
      %728 = vrot.lane.b32.xlu0 %v414, 16
      %v729 = vpop.permute.xlu0 %728
      %730 = vrot.lane.b32.xlu0 %v426, 16
      %v731 = vpop.permute.xlu0 %730
      %732 = vrot.lane.b32.xlu0 %v438, 16
      %v733 = vpop.permute.xlu0 %732
      %734 = vrot.lane.b32.xlu0 %v450, 16
      %v735 = vpop.permute.xlu0 %734
      %736 = vrot.lane.b32.xlu0 %v462, 16
      %v737 = vpop.permute.xlu0 %736
      %738 = vrot.lane.b32.xlu0 %v474, 16
      %v739 = vpop.permute.xlu0 %738
      %740 = vrot.lane.b32.xlu0 %v486, 16
      %v741 = vpop.permute.xlu0 %740
      %742 = vrot.lane.b32.xlu0 %v498, 16
      %v743 = vpop.permute.xlu0 %742
      %744 = vrot.lane.b32.xlu0 %v510, 16
      %v745 = vpop.permute.xlu0 %744
      %746 = vrot.lane.b32.xlu0 %v522, 16
      %v747 = vpop.permute.xlu0 %746
      %748 = vrot.lane.b32.xlu0 %v534, 16
      %v749 = vpop.permute.xlu0 %748
      %750 = vrot.lane.b32.xlu0 %v546, 16
      %v751 = vpop.permute.xlu0 %750
      %752 = vrot.lane.b32.xlu0 %v558, 16
      %v753 = vpop.permute.xlu0 %752
      %754 = vrot.lane.b32.xlu0 %v723, 16
      %v755 = vpop.permute.xlu0 %754
      %v756 = vrot.slane %v676, 1
      %v757 = vrot.slane %v711, 1
      %v758 = vsel %vm591, %v756, %v757
      %759 = vrot.lane.b32.xlu0 %v597, 20
      %v760 = vpop.permute.xlu0 %759
      %761 = vrot.lane.b32.xlu0 %v600, 20
      %v762 = vpop.permute.xlu0 %761
      %763 = vrot.lane.b32.xlu0 %v603, 20
      %v764 = vpop.permute.xlu0 %763
      %765 = vrot.lane.b32.xlu0 %v606, 20
      %v766 = vpop.permute.xlu0 %765
      %767 = vrot.lane.b32.xlu0 %v609, 20
      %v768 = vpop.permute.xlu0 %767
      %769 = vrot.lane.b32.xlu0 %v612, 20
      %v770 = vpop.permute.xlu0 %769
      %771 = vrot.lane.b32.xlu0 %v615, 20
      %v772 = vpop.permute.xlu0 %771
      %773 = vrot.lane.b32.xlu0 %v618, 20
      %v774 = vpop.permute.xlu0 %773
      %775 = vrot.lane.b32.xlu0 %v621, 20
      %v776 = vpop.permute.xlu0 %775
      %777 = vrot.lane.b32.xlu0 %v624, 20
      %v778 = vpop.permute.xlu0 %777
      %779 = vrot.lane.b32.xlu0 %v627, 20
      %v780 = vpop.permute.xlu0 %779
      %781 = vrot.lane.b32.xlu0 %v630, 20
      %v782 = vpop.permute.xlu0 %781
      %783 = vrot.lane.b32.xlu0 %v633, 20
      %v784 = vpop.permute.xlu0 %783
      %785 = vrot.lane.b32.xlu0 %v636, 20
      %v786 = vpop.permute.xlu0 %785
      %787 = vrot.lane.b32.xlu0 %v639, 20
      %v788 = vpop.permute.xlu0 %787
      %789 = vrot.lane.b32.xlu0 %v758, 20
      %v790 = vpop.permute.xlu0 %789
      %v793 = vunpack.c.l.b16 %v235
      %v794 = vunpack.c.l.b16 %v236
      %v795 = vpack.c.b16 %v794, %v793
      %796 = vrot.lane.b32.xlu0 %v304, 24
      %v797 = vpop.permute.xlu0 %796
      %798 = vrot.lane.b32.xlu0 %v305, 24
      %v799 = vpop.permute.xlu0 %798
      %800 = vrot.lane.b32.xlu0 %v306, 24
      %v801 = vpop.permute.xlu0 %800
      %802 = vrot.lane.b32.xlu0 %v307, 24
      %v803 = vpop.permute.xlu0 %802
      %804 = vrot.lane.b32.xlu0 %v308, 24
      %v805 = vpop.permute.xlu0 %804
      %806 = vrot.lane.b32.xlu0 %v309, 24
      %v807 = vpop.permute.xlu0 %806
      %808 = vrot.lane.b32.xlu0 %v310, 24
      %v809 = vpop.permute.xlu0 %808
      %810 = vrot.lane.b32.xlu0 %v311, 24
      %v811 = vpop.permute.xlu0 %810
      %812 = vrot.lane.b32.xlu0 %v312, 24
      %v813 = vpop.permute.xlu0 %812
      %814 = vrot.lane.b32.xlu0 %v313, 24
      %v815 = vpop.permute.xlu0 %814
      %816 = vrot.lane.b32.xlu0 %v314, 24
      %v817 = vpop.permute.xlu0 %816
      %818 = vrot.lane.b32.xlu0 %v315, 24
      %v819 = vpop.permute.xlu0 %818
      %820 = vrot.lane.b32.xlu0 %v316, 24
      %v821 = vpop.permute.xlu0 %820
      %822 = vrot.lane.b32.xlu0 %v317, 24
      %v823 = vpop.permute.xlu0 %822
      %824 = vrot.lane.b32.xlu0 %v676, 24
      %v825 = vpop.permute.xlu0 %824
      %826 = vrot.lane.b32.xlu0 %v795, 24
      %v827 = vpop.permute.xlu0 %826
      %v829 = vunpack.c.l.b16 %v237
      %v830 = vpack.c.b16 %v829, %v829
      %v832 = vshrl.u32 %v795, 16
      %v834 = vshll.u32 %v795, 16
      %v836 = vrot.slane %v834, 1
      %v837 = vor.u32 %v832, %v836
      %v839 = vshll.u32 %v830, 16
      %v841 = vrot.slane %v839, 1
      %v842 = vsel %vm366, %v837, %v841
      %843 = vrot.lane.b32.xlu0 %v402, 28
      %v844 = vpop.permute.xlu0 %843
      %845 = vrot.lane.b32.xlu0 %v414, 28
      %v846 = vpop.permute.xlu0 %845
      %847 = vrot.lane.b32.xlu0 %v426, 28
      %v848 = vpop.permute.xlu0 %847
      %849 = vrot.lane.b32.xlu0 %v438, 28
      %v850 = vpop.permute.xlu0 %849
      %851 = vrot.lane.b32.xlu0 %v450, 28
      %v852 = vpop.permute.xlu0 %851
      %853 = vrot.lane.b32.xlu0 %v462, 28
      %v854 = vpop.permute.xlu0 %853
      %855 = vrot.lane.b32.xlu0 %v474, 28
      %v856 = vpop.permute.xlu0 %855
      %857 = vrot.lane.b32.xlu0 %v486, 28
      %v858 = vpop.permute.xlu0 %857
      %859 = vrot.lane.b32.xlu0 %v498, 28
      %v860 = vpop.permute.xlu0 %859
      %861 = vrot.lane.b32.xlu0 %v510, 28
      %v862 = vpop.permute.xlu0 %861
      %863 = vrot.lane.b32.xlu0 %v522, 28
      %v864 = vpop.permute.xlu0 %863
      %865 = vrot.lane.b32.xlu0 %v534, 28
      %v866 = vpop.permute.xlu0 %865
      %867 = vrot.lane.b32.xlu0 %v546, 28
      %v868 = vpop.permute.xlu0 %867
      %869 = vrot.lane.b32.xlu0 %v558, 28
      %v870 = vpop.permute.xlu0 %869
      %871 = vrot.lane.b32.xlu0 %v723, 28
      %v872 = vpop.permute.xlu0 %871
      %873 = vrot.lane.b32.xlu0 %v842, 28
      %v874 = vpop.permute.xlu0 %873
      %v875 = vrot.slane %v795, 1
      %v876 = vrot.slane %v830, 1
      %v877 = vsel %vm591, %v875, %v876
      %878 = vrot.lane.b32.xlu0 %v600, 32
      %v879 = vpop.permute.xlu0 %878
      %880 = vrot.lane.b32.xlu0 %v603, 32
      %v881 = vpop.permute.xlu0 %880
      %882 = vrot.lane.b32.xlu0 %v606, 32
      %v883 = vpop.permute.xlu0 %882
      %884 = vrot.lane.b32.xlu0 %v609, 32
      %v885 = vpop.permute.xlu0 %884
      %886 = vrot.lane.b32.xlu0 %v612, 32
      %v887 = vpop.permute.xlu0 %886
      %888 = vrot.lane.b32.xlu0 %v615, 32
      %v889 = vpop.permute.xlu0 %888
      %890 = vrot.lane.b32.xlu0 %v618, 32
      %v891 = vpop.permute.xlu0 %890
      %892 = vrot.lane.b32.xlu0 %v621, 32
      %v893 = vpop.permute.xlu0 %892
      %894 = vrot.lane.b32.xlu0 %v624, 32
      %v895 = vpop.permute.xlu0 %894
      %896 = vrot.lane.b32.xlu0 %v627, 32
      %v897 = vpop.permute.xlu0 %896
      %898 = vrot.lane.b32.xlu0 %v630, 32
      %v899 = vpop.permute.xlu0 %898
      %900 = vrot.lane.b32.xlu0 %v633, 32
      %v901 = vpop.permute.xlu0 %900
      %902 = vrot.lane.b32.xlu0 %v636, 32
      %v903 = vpop.permute.xlu0 %902
      %904 = vrot.lane.b32.xlu0 %v639, 32
      %v905 = vpop.permute.xlu0 %904
      %906 = vrot.lane.b32.xlu0 %v758, 32
      %v907 = vpop.permute.xlu0 %906
      %908 = vrot.lane.b32.xlu0 %v877, 32
      %v909 = vpop.permute.xlu0 %908
      %vm910 = vcmask 31744
      %v912 = vsel %vm910, %v302, %v560
      %v914 = vsel %vm910, %v303, %v562
      %v916 = vsel %vm910, %v304, %v564
      %v918 = vsel %vm910, %v305, %v566
      %v920 = vsel %vm910, %v306, %v568
      %v922 = vsel %vm910, %v307, %v570
      %v924 = vsel %vm910, %v308, %v572
      %v926 = vsel %vm910, %v309, %v574
      %v928 = vsel %vm910, %v310, %v576
      %v930 = vsel %vm910, %v311, %v578
      %v932 = vsel %vm910, %v312, %v580
      %v934 = vsel %vm910, %v313, %v582
      %v936 = vsel %vm910, %v314, %v584
      %v938 = vsel %vm910, %v315, %v586
      %v940 = vsel %vm910, %v316, %v588
      %v942 = vsel %vm910, %v317, %v590
      %vm943 = vcmask 64512
      %v945 = vsel %vm943, %v912, %v641
      %v947 = vsel %vm943, %v914, %v643
      %v949 = vsel %vm943, %v916, %v645
      %v951 = vsel %vm943, %v918, %v647
      %v953 = vsel %vm943, %v920, %v649
      %v955 = vsel %vm943, %v922, %v651
      %v957 = vsel %vm943, %v924, %v653
      %v959 = vsel %vm943, %v926, %v655
      %v961 = vsel %vm943, %v928, %v657
      %v963 = vsel %vm943, %v930, %v659
      %v965 = vsel %vm943, %v932, %v661
      %v967 = vsel %vm943, %v934, %v663
      %v969 = vsel %vm943, %v936, %v665
      %v971 = vsel %vm943, %v938, %v667
      %v973 = vsel %vm943, %v940, %v669
      %v975 = vsel %vm943, %v942, %v671
      %vm976 = vcmask 97280
      %v978 = vsel %vm976, %v945, %v678
      %v980 = vsel %vm976, %v947, %v680
      %v982 = vsel %vm976, %v949, %v682
      %v984 = vsel %vm976, %v951, %v684
      %v986 = vsel %vm976, %v953, %v686
      %v988 = vsel %vm976, %v955, %v688
      %v990 = vsel %vm976, %v957, %v690
      %v992 = vsel %vm976, %v959, %v692
      %v994 = vsel %vm976, %v961, %v694
      %v996 = vsel %vm976, %v963, %v696
      %v998 = vsel %vm976, %v965, %v698
      %v1000 = vsel %vm976, %v967, %v700
      %v1002 = vsel %vm976, %v969, %v702
      %v1004 = vsel %vm976, %v971, %v704
      %v1006 = vsel %vm976, %v973, %v706
      %v1008 = vsel %vm976, %v975, %v708
      %vm1009 = vcmask 130048
      %v1011 = vsel %vm1009, %v978, %v725
      %v1013 = vsel %vm1009, %v980, %v727
      %v1015 = vsel %vm1009, %v982, %v729
      %v1017 = vsel %vm1009, %v984, %v731
      %v1019 = vsel %vm1009, %v986, %v733
      %v1021 = vsel %vm1009, %v988, %v735
      %v1023 = vsel %vm1009, %v990, %v737
      %v1025 = vsel %vm1009, %v992, %v739
      %v1027 = vsel %vm1009, %v994, %v741
      %v1029 = vsel %vm1009, %v996, %v743
      %v1031 = vsel %vm1009, %v998, %v745
      %v1033 = vsel %vm1009, %v1000, %v747
      %v1035 = vsel %vm1009, %v1002, %v749
      %v1037 = vsel %vm1009, %v1004, %v751
      %v1039 = vsel %vm1009, %v1006, %v753
      %v1041 = vsel %vm1009, %v1008, %v755
      %vm1042 = vcmask 162816
      %v1044 = vsel %vm1042, %v1011, %v760
      %v1046 = vsel %vm1042, %v1013, %v762
      %v1048 = vsel %vm1042, %v1015, %v764
      %v1050 = vsel %vm1042, %v1017, %v766
      %v1052 = vsel %vm1042, %v1019, %v768
      %v1054 = vsel %vm1042, %v1021, %v770
      %v1056 = vsel %vm1042, %v1023, %v772
      %v1058 = vsel %vm1042, %v1025, %v774
      %v1060 = vsel %vm1042, %v1027, %v776
      %v1062 = vsel %vm1042, %v1029, %v778
      %v1064 = vsel %vm1042, %v1031, %v780
      %v1066 = vsel %vm1042, %v1033, %v782
      %v1068 = vsel %vm1042, %v1035, %v784
      %v1070 = vsel %vm1042, %v1037, %v786
      %v1072 = vsel %vm1042, %v1039, %v788
      %v1074 = vsel %vm1042, %v1041, %v790
      %vm1075 = vcmask 195584
      %v1077 = vsel %vm1075, %v1044, %v797
      %v1079 = vsel %vm1075, %v1046, %v799
      %v1081 = vsel %vm1075, %v1048, %v801
      %v1083 = vsel %vm1075, %v1050, %v803
      %v1085 = vsel %vm1075, %v1052, %v805
      %v1087 = vsel %vm1075, %v1054, %v807
      %v1089 = vsel %vm1075, %v1056, %v809
      %v1091 = vsel %vm1075, %v1058, %v811
      %v1093 = vsel %vm1075, %v1060, %v813
      %v1095 = vsel %vm1075, %v1062, %v815
      %v1097 = vsel %vm1075, %v1064, %v817
      %v1099 = vsel %vm1075, %v1066, %v819
      %v1101 = vsel %vm1075, %v1068, %v821
      %v1103 = vsel %vm1075, %v1070, %v823
      %v1105 = vsel %vm1075, %v1072, %v825
      %v1107 = vsel %vm1075, %v1074, %v827
      %vm1108 = vcmask 228352
      %v1110 = vsel %vm1108, %v1077, %v844
      %v1112 = vsel %vm1108, %v1079, %v846
      %v1114 = vsel %vm1108, %v1081, %v848
      %v1116 = vsel %vm1108, %v1083, %v850
      %v1118 = vsel %vm1108, %v1085, %v852
      %v1120 = vsel %vm1108, %v1087, %v854
      %v1122 = vsel %vm1108, %v1089, %v856
      %v1124 = vsel %vm1108, %v1091, %v858
      %v1126 = vsel %vm1108, %v1093, %v860
      %v1128 = vsel %vm1108, %v1095, %v862
      %v1130 = vsel %vm1108, %v1097, %v864
      %v1132 = vsel %vm1108, %v1099, %v866
      %v1134 = vsel %vm1108, %v1101, %v868
      %v1136 = vsel %vm1108, %v1103, %v870
      %v1138 = vsel %vm1108, %v1105, %v872
      %v1140 = vsel %vm1108, %v1107, %v874
      %vm1141 = vcmask 261120
      %v1143 = vsel %vm1141, %v1110, %v879
      %v1145 = vsel %vm1141, %v1112, %v881
      %v1147 = vsel %vm1141, %v1114, %v883
      %v1149 = vsel %vm1141, %v1116, %v885
      %v1151 = vsel %vm1141, %v1118, %v887
      %v1153 = vsel %vm1141, %v1120, %v889
      %v1155 = vsel %vm1141, %v1122, %v891
      %v1157 = vsel %vm1141, %v1124, %v893
      %v1159 = vsel %vm1141, %v1126, %v895
      %v1161 = vsel %vm1141, %v1128, %v897
      %v1163 = vsel %vm1141, %v1130, %v899
      %v1165 = vsel %vm1141, %v1132, %v901
      %v1167 = vsel %vm1141, %v1134, %v903
      %v1169 = vsel %vm1141, %v1136, %v905
      %v1171 = vsel %vm1141, %v1138, %v907
      %v1173 = vsel %vm1141, %v1140, %v909
      %v1174 = vld [vmem:[%s1] sm:$0xf]
      %v1175 = vld [vmem:[%s1 + $0x4] sm:$0xf]
      %v1176 = vld [vmem:[%s1 + $0x8] sm:$0xf]
      %v1177 = vld [vmem:[%s1 + $0xc] sm:$0xf]
      %v1178 = vld [vmem:[%s1 + $0x10] sm:$0x3]
      %v1184 = vunpack.c.l.b16 %v1174
      %v1185 = vunpack.c.l.b16 %v1175
      %v1186 = vunpack.c.l.b16 %v1176
      %v1187 = vunpack.c.l.b16 %v1177
      %v1188 = vunpack.c.l.b16 %v1178
      %v1189 = vpack.c.b16 %v1185, %v1184
      %v1190 = vpack.c.b16 %v1187, %v1186
      %v1191 = vpack.c.b16 %v1188, %v1188
      %vm1194 = vcmask 293888
      %v1195 = vsel %vm1194, %v1143, 0
      %v1197 = vsel %vm1194, %v1145, 0
      %v1199 = vsel %vm1194, %v1147, 0
      %v1201 = vsel %vm1194, %v1149, 0
      %v1203 = vsel %vm1194, %v1151, 0
      %v1205 = vsel %vm1194, %v1153, 0
      %v1207 = vsel %vm1194, %v1155, 0
      %v1209 = vsel %vm1194, %v1157, 0
      %v1211 = vsel %vm1194, %v1159, 0
      %v1213 = vsel %vm1194, %v1161, 0
      %v1215 = vsel %vm1194, %v1163, 0
      %v1217 = vsel %vm1194, %v1165, 0
      %v1219 = vsel %vm1194, %v1167, 0
      %v1221 = vsel %vm1194, %v1169, 0
      %v1223 = vsel %vm1194, %v1171, 0
      %v1225 = vsel %vm1194, %v1173, 0
      %vm1227 = vcmask 1041408
      %v1229 = vsel %vm1227, %v1191, 0
      %1231 = vmatpush.bf16.msra.mxu0 0
      %1232 = vmatpush.bf16.msra.mxu0 0
      %1233 = vmatpush.bf16.msra.mxu0 0
      %1234 = vmatpush.bf16.msra.mxu0 0
      %1235 = vmatpush.bf16.msra.mxu0 0
      %1236 = vmatpush.bf16.msra.mxu0 %v1229
      %1237 = vmatpush.bf16.msra.mxu0 %v1190
      %1238 = vmatpush.bf16.msra.mxu0 %v1189
      %1239 = vmatmul.bf16.gmra.mxu0 %v1195
      %v1240 = vpop.f32.mrf.mxu0
      %v1241 = vadd.f32 0.0, %v1240
      %v1242 = vpop.f32.mrf.mxu0
      %v1243 = vadd.f32 0.0, %v1242
      %1244 = vmatmul.bf16.gmra.mxu0 %v1197
      %v1245 = vpop.f32.mrf.mxu0
      %v1246 = vadd.f32 0.0, %v1245
      %v1247 = vpop.f32.mrf.mxu0
      %v1248 = vadd.f32 0.0, %v1247
      %1249 = vmatmul.bf16.gmra.mxu0 %v1199
      %v1250 = vpop.f32.mrf.mxu0
      %v1251 = vadd.f32 0.0, %v1250
      %v1252 = vpop.f32.mrf.mxu0
      %v1253 = vadd.f32 0.0, %v1252
      %1254 = vmatmul.bf16.gmra.mxu0 %v1201
      %v1255 = vpop.f32.mrf.mxu0
      %v1256 = vadd.f32 0.0, %v1255
      %v1257 = vpop.f32.mrf.mxu0
      %v1258 = vadd.f32 0.0, %v1257
      %1259 = vmatmul.bf16.gmra.mxu0 %v1203
      %v1260 = vpop.f32.mrf.mxu0
      %v1261 = vadd.f32 0.0, %v1260
      %v1262 = vpop.f32.mrf.mxu0
      %v1263 = vadd.f32 0.0, %v1262
      %1264 = vmatmul.bf16.gmra.mxu0 %v1205
      %v1265 = vpop.f32.mrf.mxu0
      %v1266 = vadd.f32 0.0, %v1265
      %v1267 = vpop.f32.mrf.mxu0
      %v1268 = vadd.f32 0.0, %v1267
      %1269 = vmatmul.bf16.gmra.mxu0 %v1207
      %v1270 = vpop.f32.mrf.mxu0
      %v1271 = vadd.f32 0.0, %v1270
      %v1272 = vpop.f32.mrf.mxu0
      %v1273 = vadd.f32 0.0, %v1272
      %1274 = vmatmul.bf16.gmra.mxu0 %v1209
      %v1275 = vpop.f32.mrf.mxu0
      %v1276 = vadd.f32 0.0, %v1275
      %v1277 = vpop.f32.mrf.mxu0
      %v1278 = vadd.f32 0.0, %v1277
      %1279 = vmatmul.bf16.gmra.mxu0 %v1211
      %v1280 = vpop.f32.mrf.mxu0
      %v1281 = vadd.f32 0.0, %v1280
      %v1282 = vpop.f32.mrf.mxu0
      %v1283 = vadd.f32 0.0, %v1282
      %1284 = vmatmul.bf16.gmra.mxu0 %v1213
      %v1285 = vpop.f32.mrf.mxu0
      %v1286 = vadd.f32 0.0, %v1285
      %v1287 = vpop.f32.mrf.mxu0
      %v1288 = vadd.f32 0.0, %v1287
      %1289 = vmatmul.bf16.gmra.mxu0 %v1215
      %v1290 = vpop.f32.mrf.mxu0
      %v1291 = vadd.f32 0.0, %v1290
      %v1292 = vpop.f32.mrf.mxu0
      %v1293 = vadd.f32 0.0, %v1292
      %1294 = vmatmul.bf16.gmra.mxu0 %v1217
      %v1295 = vpop.f32.mrf.mxu0
      %v1296 = vadd.f32 0.0, %v1295
      %v1297 = vpop.f32.mrf.mxu0
      %v1298 = vadd.f32 0.0, %v1297
      %1299 = vmatmul.bf16.gmra.mxu0 %v1219
      %v1300 = vpop.f32.mrf.mxu0
      %v1301 = vadd.f32 0.0, %v1300
      %v1302 = vpop.f32.mrf.mxu0
      %v1303 = vadd.f32 0.0, %v1302
      %1304 = vmatmul.bf16.gmra.mxu0 %v1221
      %v1305 = vpop.f32.mrf.mxu0
      %v1306 = vadd.f32 0.0, %v1305
      %v1307 = vpop.f32.mrf.mxu0
      %v1308 = vadd.f32 0.0, %v1307
      %1309 = vmatmul.bf16.gmra.mxu0 %v1223
      %v1310 = vpop.f32.mrf.mxu0
      %v1311 = vadd.f32 0.0, %v1310
      %v1312 = vpop.f32.mrf.mxu0
      %v1313 = vadd.f32 0.0, %v1312
      %1314 = vmatmul.bf16.gmra.mxu0 %v1225
      %v1315 = vpop.f32.mrf.mxu0
      %v1316 = vadd.f32 0.0, %v1315
      %v1317 = vpop.f32.mrf.mxu0
      %v1318 = vadd.f32 0.0, %v1317
      %1319 = vdwg.mxu0
      %v1320 = vadd.f32 %v1241, %v1243
      %v1321 = vadd.f32 %v1320, %v1246
      %v1322 = vadd.f32 %v1321, %v1248
      %v1323 = vadd.f32 %v1322, %v1251
      %v1324 = vadd.f32 %v1323, %v1253
      %v1325 = vadd.f32 %v1324, %v1256
      %v1326 = vadd.f32 %v1325, %v1258
      %v1327 = vadd.f32 %v1326, %v1261
      %v1328 = vadd.f32 %v1327, %v1263
      %v1329 = vadd.f32 %v1328, %v1266
      %v1330 = vadd.f32 %v1329, %v1268
      %v1331 = vadd.f32 %v1330, %v1271
      %v1332 = vadd.f32 %v1331, %v1273
      %v1333 = vadd.f32 %v1332, %v1276
      %v1334 = vadd.f32 %v1333, %v1278
      %v1335 = vadd.f32 %v1334, %v1281
      %v1336 = vadd.f32 %v1335, %v1283
      %v1337 = vadd.f32 %v1336, %v1286
      %v1338 = vadd.f32 %v1337, %v1288
      %v1339 = vadd.f32 %v1338, %v1291
      %v1340 = vadd.f32 %v1339, %v1293
      %v1341 = vadd.f32 %v1340, %v1296
      %v1342 = vadd.f32 %v1341, %v1298
      %v1343 = vadd.f32 %v1342, %v1301
      %v1344 = vadd.f32 %v1343, %v1303
      %v1345 = vadd.f32 %v1344, %v1306
      %v1346 = vadd.f32 %v1345, %v1308
      %v1347 = vadd.f32 %v1346, %v1311
      %v1348 = vadd.f32 %v1347, %v1313
      %v1349 = vadd.f32 %v1348, %v1316
      %v1350 = vadd.f32 %v1349, %v1318
      %v1351 = vrot.slane %v1350, 4
      %v1352 = vadd.f32 %v1350, %v1351
      %v1353 = vrot.slane %v1352, 2
      %v1354 = vadd.f32 %v1352, %v1353
      %v1355 = vrot.slane %v1354, 1
      %v1356 = vadd.f32 %v1354, %v1355
      %v1357 = vmul.f32 %v1241, %v1241
      %v1358 = vmul.f32 %v1243, %v1243
      %v1359 = vmul.f32 %v1246, %v1246
      %v1360 = vmul.f32 %v1248, %v1248
      %v1361 = vmul.f32 %v1251, %v1251
      %v1362 = vmul.f32 %v1253, %v1253
      %v1363 = vmul.f32 %v1256, %v1256
      %v1364 = vmul.f32 %v1258, %v1258
      %v1365 = vmul.f32 %v1261, %v1261
      %v1366 = vmul.f32 %v1263, %v1263
      %v1367 = vmul.f32 %v1266, %v1266
      %v1368 = vmul.f32 %v1268, %v1268
      %v1369 = vmul.f32 %v1271, %v1271
      %v1370 = vmul.f32 %v1273, %v1273
      %v1371 = vmul.f32 %v1276, %v1276
      %v1372 = vmul.f32 %v1278, %v1278
      %v1373 = vmul.f32 %v1281, %v1281
      %v1374 = vmul.f32 %v1283, %v1283
      %v1375 = vmul.f32 %v1286, %v1286
      %v1376 = vmul.f32 %v1288, %v1288
      %v1377 = vmul.f32 %v1291, %v1291
      %v1378 = vmul.f32 %v1293, %v1293
      %v1379 = vmul.f32 %v1296, %v1296
      %v1380 = vmul.f32 %v1298, %v1298
      %v1381 = vmul.f32 %v1301, %v1301
      %v1382 = vmul.f32 %v1303, %v1303
      %v1383 = vmul.f32 %v1306, %v1306
      %v1384 = vmul.f32 %v1308, %v1308
      %v1385 = vmul.f32 %v1311, %v1311
      %v1386 = vmul.f32 %v1313, %v1313
      %v1387 = vmul.f32 %v1316, %v1316
      %v1388 = vmul.f32 %v1318, %v1318
      %v1389 = vadd.f32 %v1357, %v1358
      %v1390 = vadd.f32 %v1389, %v1359
      %v1391 = vadd.f32 %v1390, %v1360
      %v1392 = vadd.f32 %v1391, %v1361
      %v1393 = vadd.f32 %v1392, %v1362
      %v1394 = vadd.f32 %v1393, %v1363
      %v1395 = vadd.f32 %v1394, %v1364
      %v1396 = vadd.f32 %v1395, %v1365
      %v1397 = vadd.f32 %v1396, %v1366
      %v1398 = vadd.f32 %v1397, %v1367
      %v1399 = vadd.f32 %v1398, %v1368
      %v1400 = vadd.f32 %v1399, %v1369
      %v1401 = vadd.f32 %v1400, %v1370
      %v1402 = vadd.f32 %v1401, %v1371
      %v1403 = vadd.f32 %v1402, %v1372
      %v1404 = vadd.f32 %v1403, %v1373
      %v1405 = vadd.f32 %v1404, %v1374
      %v1406 = vadd.f32 %v1405, %v1375
      %v1407 = vadd.f32 %v1406, %v1376
      %v1408 = vadd.f32 %v1407, %v1377
      %v1409 = vadd.f32 %v1408, %v1378
      %v1410 = vadd.f32 %v1409, %v1379
      %v1411 = vadd.f32 %v1410, %v1380
      %v1412 = vadd.f32 %v1411, %v1381
      %v1413 = vadd.f32 %v1412, %v1382
      %v1414 = vadd.f32 %v1413, %v1383
      %v1415 = vadd.f32 %v1414, %v1384
      %v1416 = vadd.f32 %v1415, %v1385
      %v1417 = vadd.f32 %v1416, %v1386
      %v1418 = vadd.f32 %v1417, %v1387
      %v1419 = vadd.f32 %v1418, %v1388
      %v1420 = vrot.slane %v1419, 4
      %v1421 = vadd.f32 %v1419, %v1420
      %v1422 = vrot.slane %v1421, 2
      %v1423 = vadd.f32 %v1421, %v1422
      %v1424 = vrot.slane %v1423, 1
      %v1425 = vadd.f32 %v1423, %v1424
      %vm1426 = vcmask 1040384
      %v1427 = vsel %vm1426, %v1356, %v1425
      %1428 = vst [vmem:[%s182] sm:$0x3] %v1427
      %v1429 = vpack.c.bf16 %v1241, %v1241
      %v1430 = vpack.c.bf16 %v1243, %v1243
      %v1431 = vpack.c.bf16 %v1246, %v1246
      %v1432 = vpack.c.bf16 %v1248, %v1248
      %v1433 = vpack.c.bf16 %v1251, %v1251
      %v1434 = vpack.c.bf16 %v1253, %v1253
      %v1435 = vpack.c.bf16 %v1256, %v1256
      %v1436 = vpack.c.bf16 %v1258, %v1258
      %v1437 = vpack.c.bf16 %v1261, %v1261
      %v1438 = vpack.c.bf16 %v1263, %v1263
      %v1439 = vpack.c.bf16 %v1266, %v1266
      %v1440 = vpack.c.bf16 %v1268, %v1268
      %v1441 = vpack.c.bf16 %v1271, %v1271
      %v1442 = vpack.c.bf16 %v1273, %v1273
      %v1443 = vpack.c.bf16 %v1276, %v1276
      %v1444 = vpack.c.bf16 %v1278, %v1278
      %v1445 = vpack.c.bf16 %v1281, %v1281
      %v1446 = vpack.c.bf16 %v1283, %v1283
      %v1447 = vpack.c.bf16 %v1286, %v1286
      %v1448 = vpack.c.bf16 %v1288, %v1288
      %v1449 = vpack.c.bf16 %v1291, %v1291
      %v1450 = vpack.c.bf16 %v1293, %v1293
      %v1451 = vpack.c.bf16 %v1296, %v1296
      %v1452 = vpack.c.bf16 %v1298, %v1298
      %v1453 = vpack.c.bf16 %v1301, %v1301
      %v1454 = vpack.c.bf16 %v1303, %v1303
      %v1455 = vpack.c.bf16 %v1306, %v1306
      %v1456 = vpack.c.bf16 %v1308, %v1308
      %v1457 = vpack.c.bf16 %v1311, %v1311
      %v1458 = vpack.c.bf16 %v1313, %v1313
      %v1459 = vpack.c.bf16 %v1316, %v1316
      %v1460 = vpack.c.bf16 %v1318, %v1318
      %1461 = vst [vmem:[%s177] sm:$0xf] %v1429
      %1462 = vst [vmem:[%s177 + $0x4] sm:$0xf] %v1430
      %1463 = vst [vmem:[%s177 + $0x8] sm:$0xf] %v1431
      %1464 = vst [vmem:[%s177 + $0xc] sm:$0xf] %v1432
      %1465 = vst [vmem:[%s177 + $0x10] sm:$0xf] %v1433
      %1466 = vst [vmem:[%s177 + $0x14] sm:$0xf] %v1434
      %1467 = vst [vmem:[%s177 + $0x18] sm:$0xf] %v1435
      %1468 = vst [vmem:[%s177 + $0x1c] sm:$0xf] %v1436
      %1469 = vst [vmem:[%s177 + $0x20] sm:$0xf] %v1437
      %1470 = vst [vmem:[%s177 + $0x24] sm:$0xf] %v1438
      %1471 = vst [vmem:[%s177 + $0x28] sm:$0xf] %v1439
      %1472 = vst [vmem:[%s177 + $0x2c] sm:$0xf] %v1440
      %1473 = vst [vmem:[%s177 + $0x30] sm:$0xf] %v1441
      %1474 = vst [vmem:[%s177 + $0x34] sm:$0xf] %v1442
      %1475 = vst [vmem:[%s177 + $0x38] sm:$0xf] %v1443
      %1476 = vst [vmem:[%s177 + $0x3c] sm:$0xf] %v1444
      %1477 = vst [vmem:[%s177 + $0x40] sm:$0xf] %v1445
      %1478 = vst [vmem:[%s177 + $0x44] sm:$0xf] %v1446
      %1479 = vst [vmem:[%s177 + $0x48] sm:$0xf] %v1447
      %1480 = vst [vmem:[%s177 + $0x4c] sm:$0xf] %v1448
      %1481 = vst [vmem:[%s177 + $0x50] sm:$0xf] %v1449
      %1482 = vst [vmem:[%s177 + $0x54] sm:$0xf] %v1450
      %1483 = vst [vmem:[%s177 + $0x58] sm:$0xf] %v1451
      %1484 = vst [vmem:[%s177 + $0x5c] sm:$0xf] %v1452
      %1485 = vst [vmem:[%s177 + $0x60] sm:$0xf] %v1453
      %1486 = vst [vmem:[%s177 + $0x64] sm:$0xf] %v1454
      %1487 = vst [vmem:[%s177 + $0x68] sm:$0xf] %v1455
      %1488 = vst [vmem:[%s177 + $0x6c] sm:$0xf] %v1456
      %1489 = vst [vmem:[%s177 + $0x70] sm:$0xf] %v1457
      %1490 = vst [vmem:[%s177 + $0x74] sm:$0xf] %v1458
      %1491 = vst [vmem:[%s177 + $0x78] sm:$0xf] %v1459
      %1492 = vst [vmem:[%s177 + $0x7c] sm:$0xf] %v1460
      %s1493 = smul.u32 32, %s15
      %p1494 = scmp.lt.s32.totalorder %s1493, 63
      %s1495 = scalar_select %p1494, %s1493, 63
      %s1496 = smul.addr %s1495, 4
      %s1497 = scalar_lea.vmem %s2, %s1496
      %p1498 = scmp.lt.s32.totalorder %s15, 1
      %s1499 = scalar_select %p1498, %s15, 1
      %s1500 = smul.addr %s1499, 2
      %s1501 = scalar_lea.vmem %s3, %s1500
      // Predicated region
      $region29: #{conv_block_forward.2} parent=27 // pred_check
        %p1502 = pneg %p80
      $region30: #{conv_block_forward.2} parent=27 // pred_check_branch
        %1504 = sbr.rel (%p1502) target = $region32
      $region31: #{conv_block_forward.2} parent=27 // pred_region
        %s1505 = smul.u32 32, %s15
      $region32: #{conv_block_forward.2} parent=27 // pred_fallthru
        _
      // Predicated region
      $region33: #{conv_block_forward.2} parent=27 // pred_check
        %p1506 = pneg %p106
      $region34: #{conv_block_forward.2} parent=27 // pred_check_branch
        %1508 = sbr.rel (%p1506) target = $region36
      $region35: #{conv_block_forward.2} parent=27 // pred_region
        _
      $region36: #{conv_block_forward.2} parent=27 // pred_fallthru
        _
    $region28: #{conv_block_forward.2} parent=5 // pred_fallthru
      _
    %p1509 = scmp.le.s32.totalorder 2, %s10
    // Predicated region
    $region37: #{conv_block_forward.2} parent=5 // pred_check
      %p1510 = pneg %p1509
    $region38: #{conv_block_forward.2} parent=5 // pred_check_branch
      %1512 = sbr.rel (%p1510) target = $region40
    $region39: #{conv_block_forward.2} parent=5 // pred_region
      %s1513 = ssub.s32 %s10, 2
      // Predicated region
      $region41: #{conv_block_forward.2} parent=39 // pred_check
        %p1514 = pneg %p86
      $region42: #{conv_block_forward.2} parent=39 // pred_check_branch
        %1516 = sbr.rel (%p1514) target = $region44
      $region43: #{conv_block_forward.2} parent=39 // pred_region
        %s1517 = smul.u32 32, %s16
        %p1518 = scmp.lt.s32.totalorder %s1517, 63
        %s1519 = scalar_select %p1518, %s1517, 63
        %s1520 = smul.addr %s1519, 4
        %s1521 = scalar_lea.vmem %s2, %s1520
      $region44: #{conv_block_forward.2} parent=39 // pred_fallthru
        _
      // Predicated region
      $region45: #{conv_block_forward.2} parent=39 // pred_check
        %p1522 = pneg %p112
      $region46: #{conv_block_forward.2} parent=39 // pred_check_branch
        %1524 = sbr.rel (%p1522) target = $region48
      $region47: #{conv_block_forward.2} parent=39 // pred_region
        %p1525 = scmp.lt.s32.totalorder %s16, 1
        %s1526 = scalar_select %p1525, %s16, 1
        %s1527 = smul.addr %s1526, 2
        %s1528 = scalar_lea.vmem %s3, %s1527
      $region48: #{conv_block_forward.2} parent=39 // pred_fallthru
        _
    $region40: #{conv_block_forward.2} parent=5 // pred_fallthru
      _
  $region6: #{conv_block_forward.2} parent=0 // loop_footer
    %s14 = sadd.s32 1, %s10
  $region7: #{conv_block_forward.2} parent=0 // loop_footer_branch
    %9 = sbr.rel target = $region3
  $region8: #{conv_block_forward.2} parent=0 // loop_exit
    _

</llo_original>
